<compile_context>
chip_gen: v6e
topology: v6e:2x2x1
jax: 0.10.0
libtpu: 0.0.40
codegen_flags: <defaults>
</compile_context>

<pallas_src>
import math
from functools import partial

import jax
import jax.numpy as jnp
from jax import lax
from jax.experimental import pallas as pl
from jax.experimental.pallas import tpu as pltpu

PI = math.pi
LOG2 = math.log(2.0)


def _ssp(x):
    # shifted softplus: log(1 + exp(x)) - log(2), numerically stable, f32.
    return jnp.maximum(x, 0.0) + jnp.log(1.0 + jnp.exp(-jnp.abs(x))) - LOG2


# ---------------------------------------------------------------------------
# fused Pallas kernel: smearing -> num_interactions blocks -> readout
# ---------------------------------------------------------------------------

def schnet_fused_kernel(
        # scalar-prefetch refs (SMEM)
        row_ref, col_ref,
        # inputs (VMEM)
        h0_ref, w2d_ref, offset_ref,
        mw1_ref, mb1_ref, mw2_ref, mb2_ref,
        lw1_ref, lw2_ref, lb2_ref, lw_ref, lb_ref,
        r1w_ref, r1b_ref, r2w_ref, r2b_ref, pool_ref,
        # output
        out_ref,
        # VMEM scratch (resident across the interaction-block grid axis)
        h_sc, attr_sc, c_sc, x1_sc, w_sc, agg_sc,
        *, coeff, cutoff, n_edges):
    f32 = jnp.float32
    bf16 = jnp.bfloat16
    i = pl.program_id(0)

    # ---- one-time: Gaussian smearing + cosine cutoff (+ edge mask), h init --
    @pl.when(i == 0)
    def _init():
        w = w2d_ref[...]                                  # (E, 1)
        d = w - offset_ref[...]                           # (E, G)
        attr_sc[...] = jnp.exp(coeff * d * d)
        c = 0.5 * (jnp.cos(w * (PI / cutoff)) + 1.0)
        mask = (w <= cutoff).astype(f32)
        c_sc[...] = c * mask                              # masked edges -> message 0
        h_sc[...] = h0_ref[...]

    h = h_sc[...]                                         # (N, H), VMEM-resident

    # ---- filter-generating MLP on edge_attr (bf16 matmuls, f32 accum) ------
    W = jnp.dot(attr_sc[...].astype(bf16), mw1_ref[...],
                preferred_element_type=f32) + mb1_ref[...]
    W = _ssp(W)
    W = jnp.dot(W.astype(bf16), mw2_ref[...],
                preferred_element_type=f32) + mb2_ref[...]
    w_sc[...] = W * c_sc[...]                             # (E, F)

    # ---- CFConv.lin1 (no bias) ----------------------------------------------
    x1_sc[...] = jnp.dot(h.astype(bf16), lw1_ref[...], preferred_element_type=f32)

    # ---- real gather + message + segment accumulation (scatter-add) ---------
    agg_sc[...] = jnp.zeros_like(agg_sc)

    def edge_body(e, carry):
        src = row_ref[e]                                  # SMEM scalar index
        dst = col_ref[e]
        xj = x1_sc[pl.ds(src, 1), :]                      # (1, F) gather x[src]
        msg = xj * w_sc[pl.ds(e, 1), :]                   # message
        agg_sc[pl.ds(dst, 1), :] = agg_sc[pl.ds(dst, 1), :] + msg
        return carry

    lax.fori_loop(0, n_edges, edge_body, 0)

    # ---- CFConv.lin2 -> block act -> block lin, residual --------------------
    x2 = jnp.dot(agg_sc[...].astype(bf16), lw2_ref[...],
                 preferred_element_type=f32) + lb2_ref[...]
    x2 = _ssp(x2)
    upd = jnp.dot(x2.astype(bf16), lw_ref[...], preferred_element_type=f32) + lb_ref[...]
    h_sc[...] = h + upd                                   # h = h + interaction(h)

    # ---- readout on the last interaction block ------------------------------
    @pl.when(i == pl.num_programs(0) - 1)
    def _readout():
        hf = h_sc[...]
        t = _ssp(jnp.dot(hf.astype(bf16), r1w_ref[...],
                         preferred_element_type=f32) + r1b_ref[...])
        y = jnp.dot(t.astype(bf16), r2w_ref[...],
                    preferred_element_type=f32) + r2b_ref[...]            # (N, 1)
        out_ref[...] = jnp.dot(pool_ref[...], y, preferred_element_type=f32)  # (B, 1)


# ---------------------------------------------------------------------------
# parameter construction (deterministic, xavier-uniform like the module)
# ---------------------------------------------------------------------------

def _xavier(key, fan_in, fan_out):
    limit = math.sqrt(6.0 / (fan_in + fan_out))
    return jax.random.uniform(key, (fan_in, fan_out), jnp.float32, -limit, limit)


def init_schnet_params(key, hidden, num_filters, num_gaussians,
                       num_interactions, cutoff):
    L, H, F, G = num_interactions, hidden, num_filters, num_gaussians
    keys = jax.random.split(key, 4 + 6 * L)
    ki = iter(keys)
    bf16, f32 = jnp.bfloat16, jnp.float32

    params = {}
    # TODO(synk): OGB AtomEncoder is not defined in the snippet; approximated by
    # a deterministic Embedding(100, hidden) lookup of z.
    params['emb'] = jax.random.uniform(next(ki), (100, H), f32,
                                       -math.sqrt(3), math.sqrt(3))

    offset = jnp.linspace(0.0, cutoff, G).astype(f32)
    params['offset'] = offset[None, :]                                # (1, G)
    spacing = float(cutoff) / float(G - 1) if G > 1 else 1.0          # guard G == 1
    params['coeff'] = -0.5 / spacing ** 2

    mw1, mb1, mw2, mb2, lw1, lw2, lb2, lw, lb = ([] for _ in range(9))
    for _ in range(L):
        mw1.append(_xavier(next(ki), G, F))
        mb1.append(jnp.zeros((1, F), f32))
        mw2.append(_xavier(next(ki), F, F))
        # mlp[2].bias keeps PyTorch's default Linear init (never reset in module)
        mb2.append(jax.random.uniform(next(ki), (1, F), f32,
                                      -1.0 / math.sqrt(F), 1.0 / math.sqrt(F)))
        lw1.append(_xavier(next(ki), H, F))                           # CFConv.lin1 (no bias)
        lw2.append(_xavier(next(ki), F, H))                           # CFConv.lin2
        lb2.append(jnp.zeros((1, H), f32))
        lw.append(_xavier(next(ki), H, H))                            # InteractionBlock.lin
        lb.append(jnp.zeros((1, H), f32))

    stack = lambda xs, dt: jnp.stack(xs).astype(dt)
    params['mw1'] = stack(mw1, bf16)
    params['mb1'] = stack(mb1, f32)
    params['mw2'] = stack(mw2, bf16)
    params['mb2'] = stack(mb2, f32)
    params['lw1'] = stack(lw1, bf16)
    params['lw2'] = stack(lw2, bf16)
    params['lb2'] = stack(lb2, f32)
    params['lw'] = stack(lw, bf16)
    params['lb'] = stack(lb, f32)

    # readout head
    params['r1w'] = _xavier(next(ki), H, H // 2).astype(bf16)
    params['r1b'] = jnp.zeros((1, H // 2), f32)
    params['r2w'] = _xavier(next(ki), H // 2, 1).astype(bf16)
    params['r2b'] = jnp.zeros((1, 1), f32)
    return params


# ---------------------------------------------------------------------------
# forward (glue in plain JAX, all compute inside one pallas_call)
# ---------------------------------------------------------------------------

def schnet_forward(z, batch, dist_index, dist_weight, params, num_graphs, cutoff):
    N = int(z.shape[0])
    E = int(dist_weight.shape[0])
    L, G, F = params['mw1'].shape
    H = params['lw'].shape[1]
    H2 = params['r1w'].shape[1]
    B = int(num_graphs)

    h0 = params['emb'][z].astype(jnp.float32)                 # (N, H) embedding (glue)
    w2d = dist_weight.astype(jnp.float32)[:, None]            # (E, 1)
    row = dist_index[0].astype(jnp.int32)                     # source j
    col = dist_index[1].astype(jnp.int32)                     # target i
    # (B, N) pooling selector built lane-dense directly (no HBM transpose).
    pool_m = (batch[None, :] == jnp.arange(B, dtype=batch.dtype)[:, None]).astype(jnp.float32)

    kern = partial(schnet_fused_kernel, coeff=float(params['coeff']),
                   cutoff=float(cutoff), n_edges=E)

    const2 = lambda i, row_r, col_r: (0, 0)
    blk3 = lambda i, row_r, col_r: (i, 0, 0)

    grid_spec = pltpu.PrefetchScalarGridSpec(
        num_scalar_prefetch=2,
        grid=(L,),
        in_specs=[
            pl.BlockSpec((N, H), const2),        # h0
            pl.BlockSpec((E, 1), const2),        # dist weights
            pl.BlockSpec((1, G), const2),        # gaussian offsets
            pl.BlockSpec((None, G, F), blk3),    # mw1   (per-block)
            pl.BlockSpec((None, 1, F), blk3),    # mb1
            pl.BlockSpec((None, F, F), blk3),    # mw2
            pl.BlockSpec((None, 1, F), blk3),    # mb2
            pl.BlockSpec((None, H, F), blk3),    # lw1
            pl.BlockSpec((None, F, H), blk3),    # lw2
            pl.BlockSpec((None, 1, H), blk3),    # lb2
            pl.BlockSpec((None, H, H), blk3),    # lw
            pl.BlockSpec((None, 1, H), blk3),    # lb
            pl.BlockSpec((H, H2), const2),       # readout lin1 W
            pl.BlockSpec((1, H2), const2),       # readout lin1 b
            pl.BlockSpec((H2, 1), const2),       # readout lin2 W
            pl.BlockSpec((1, 1), const2),        # readout lin2 b
            pl.BlockSpec((B, N), const2),        # pooling selector
        ],
        out_specs=pl.BlockSpec((B, 1), const2),
        scratch_shapes=[
            pltpu.VMEM((N, H), jnp.float32),     # h (resident across blocks)
            pltpu.VMEM((E, G), jnp.float32),     # edge_attr (computed once)
            pltpu.VMEM((E, 1), jnp.float32),     # cosine cutoff * mask
            pltpu.VMEM((N, F), jnp.float32),     # lin1(h)
            pltpu.VMEM((E, F), jnp.float32),     # filter W
            pltpu.VMEM((N, F), jnp.float32),     # scatter-add accumulator
        ],
    )

    out = pl.pallas_call(
        kern,
        grid_spec=grid_spec,
        out_shape=jax.ShapeDtypeStruct((B, 1), jnp.float32),
        compiler_params=pltpu.CompilerParams(
            dimension_semantics=("arbitrary",),       # sequential dependence through h
            vmem_limit_bytes=32 * 1024 * 1024,
        ),
    )(row, col,
      h0, w2d, params['offset'],
      params['mw1'], params['mb1'], params['mw2'], params['mb2'],
      params['lw1'], params['lw2'], params['lb2'], params['lw'], params['lb'],
      params['r1w'], params['r1b'], params['r2w'], params['r2b'], pool_m)
    return out                                                # (num_graphs, 1)


# ---------------------------------------------------------------------------
# main
# ---------------------------------------------------------------------------

if __name__ == "__main__":
    HIDDEN = 32
    NUM_FILTERS = 32
    NUM_GAUSSIANS = 16
    NUM_INTERACTIONS = 2
    CUTOFF = 10.0
    N_NODES = 16
    N_EDGES = 48
    N_GRAPHS = 2

    key = jax.random.PRNGKey(0)
    k_param, k_z, k_e, k_w = jax.random.split(key, 4)

    params = init_schnet_params(k_param, HIDDEN, NUM_FILTERS, NUM_GAUSSIANS,
                                NUM_INTERACTIONS, CUTOFF)

    z = jax.random.randint(k_z, (N_NODES,), 1, 10, dtype=jnp.int32)
    batch = jnp.concatenate([jnp.zeros((N_NODES // 2,), jnp.int32),
                             jnp.ones((N_NODES - N_NODES // 2,), jnp.int32)])
    dist_index = jax.random.randint(k_e, (2, N_EDGES), 0, N_NODES, dtype=jnp.int32)
    dist_weight = jax.random.uniform(k_w, (N_EDGES,), jnp.float32, 0.5, 12.0)  # some > cutoff

    out = schnet_forward(z, batch, dist_index, dist_weight, params,
                         N_GRAPHS, CUTOFF)
    out = jax.block_until_ready(out)
    assert out.shape == (N_GRAPHS, 1) and out.dtype == jnp.float32
    assert bool(jnp.all(jnp.isfinite(out)))
    print("KERNEL_OK")
</pallas_src>

<mosaic_0001>
module attributes {stable_mosaic.version = 11 : i64} {
  func.func @schnet_fused_kernel(%arg0: i32, %arg1: memref<48xi32, #tpu.memory_space<smem>>, %arg2: memref<48xi32, #tpu.memory_space<smem>>, %arg3: memref<16x32xf32, #tpu.memory_space<vmem>>, %arg4: memref<48x1xf32, #tpu.memory_space<vmem>>, %arg5: memref<1x16xf32, #tpu.memory_space<vmem>>, %arg6: memref<1x16x32xbf16, #tpu.memory_space<vmem>>, %arg7: memref<1x1x32xf32, #tpu.memory_space<vmem>>, %arg8: memref<1x32x32xbf16, #tpu.memory_space<vmem>>, %arg9: memref<1x1x32xf32, #tpu.memory_space<vmem>>, %arg10: memref<1x32x32xbf16, #tpu.memory_space<vmem>>, %arg11: memref<1x32x32xbf16, #tpu.memory_space<vmem>>, %arg12: memref<1x1x32xf32, #tpu.memory_space<vmem>>, %arg13: memref<1x32x32xbf16, #tpu.memory_space<vmem>>, %arg14: memref<1x1x32xf32, #tpu.memory_space<vmem>>, %arg15: memref<32x16xbf16, #tpu.memory_space<vmem>>, %arg16: memref<1x16xf32, #tpu.memory_space<vmem>>, %arg17: memref<16x1xbf16, #tpu.memory_space<vmem>>, %arg18: memref<1x1xf32, #tpu.memory_space<vmem>>, %arg19: memref<2x16xf32, #tpu.memory_space<vmem>>, %arg20: memref<2x1xf32, #tpu.memory_space<vmem>>, %arg21: memref<16x32xf32, #tpu.memory_space<vmem>>, %arg22: memref<48x16xf32, #tpu.memory_space<vmem>>, %arg23: memref<48x1xf32, #tpu.memory_space<vmem>>, %arg24: memref<16x32xf32, #tpu.memory_space<vmem>>, %arg25: memref<48x32xf32, #tpu.memory_space<vmem>>, %arg26: memref<16x32xf32, #tpu.memory_space<vmem>>) attributes {dimension_semantics = [#tpu.dimension_semantics<arbitrary>], iteration_bounds = array<i64: 2>, scalar_prefetch = 2 : i64, scratch_operands = 6 : i64, tpu.core_type = #tpu.core_type<tc>, window_params = [{pipeline_mode = #tpu.pipeline_mode<synchronous>, transform_indices = @transform_0, window_bounds = array<i64: 16, 32>}, {pipeline_mode = #tpu.pipeline_mode<synchronous>, transform_indices = @transform_1, window_bounds = array<i64: 48, 1>}, {pipeline_mode = #tpu.pipeline_mode<synchronous>, transform_indices = @transform_2, window_bounds = array<i64: 1, 16>}, {transform_indices = @transform_3, window_bounds = array<i64: 1, 16, 32>}, {transform_indices = @transform_4, window_bounds = array<i64: 1, 1, 32>}, {transform_indices = @transform_5, window_bounds = array<i64: 1, 32, 32>}, {transform_indices = @transform_6, window_bounds = array<i64: 1, 1, 32>}, {transform_indices = @transform_7, window_bounds = array<i64: 1, 32, 32>}, {transform_indices = @transform_8, window_bounds = array<i64: 1, 32, 32>}, {transform_indices = @transform_9, window_bounds = array<i64: 1, 1, 32>}, {transform_indices = @transform_10, window_bounds = array<i64: 1, 32, 32>}, {transform_indices = @transform_11, window_bounds = array<i64: 1, 1, 32>}, {pipeline_mode = #tpu.pipeline_mode<synchronous>, transform_indices = @transform_12, window_bounds = array<i64: 32, 16>}, {pipeline_mode = #tpu.pipeline_mode<synchronous>, transform_indices = @transform_13, window_bounds = array<i64: 1, 16>}, {pipeline_mode = #tpu.pipeline_mode<synchronous>, transform_indices = @transform_14, window_bounds = array<i64: 16, 1>}, {pipeline_mode = #tpu.pipeline_mode<synchronous>, transform_indices = @transform_15, window_bounds = array<i64: 1, 1>}, {pipeline_mode = #tpu.pipeline_mode<synchronous>, transform_indices = @transform_16, window_bounds = array<i64: 2, 16>}, {pipeline_mode = #tpu.pipeline_mode<synchronous>, transform_indices = @transform_17, window_bounds = array<i64: 2, 1>}]} {
    %c0_i32 = arith.constant 0 : i32
    %0 = arith.cmpi eq, %arg0, %c0_i32 : i32
    %1 = arith.extui %0 : i1 to i32
    %c0_i32_0 = arith.constant 0 : i32
    %2 = arith.cmpi ne, %1, %c0_i32_0 : i32
    scf.if %2 {
      %c0_60 = arith.constant 0 : index
      %c0_61 = arith.constant 0 : index
      %79 = vector.load %arg4[%c0_60, %c0_61] : memref<48x1xf32, #tpu.memory_space<vmem>>, vector<48x1xf32>
      %c0_62 = arith.constant 0 : index
      %c0_63 = arith.constant 0 : index
      %80 = vector.load %arg5[%c0_62, %c0_63] : memref<1x16xf32, #tpu.memory_space<vmem>>, vector<1x16xf32>
      %81 = vector.broadcast %79 : vector<48x1xf32> to vector<48x16xf32>
      %82 = vector.broadcast %80 : vector<1x16xf32> to vector<48x16xf32>
      %83 = arith.subf %81, %82 : vector<48x16xf32>
      %cst_64 = arith.constant -1.125000e+00 : f32
      %84 = vector.broadcast %cst_64 : f32 to vector<48x16xf32>
      %85 = arith.mulf %84, %83 : vector<48x16xf32>
      %86 = arith.mulf %85, %83 : vector<48x16xf32>
      %87 = math.exp %86 : vector<48x16xf32>
      %c0_65 = arith.constant 0 : index
      %c0_66 = arith.constant 0 : index
      %88 = vector.load %arg22[%c0_65, %c0_66] : memref<48x16xf32, #tpu.memory_space<vmem>>, vector<48x16xf32>
      tpu.vector_store %arg22[%c0_65, %c0_66], %87 {strides = array<i32>} : memref<48x16xf32, #tpu.memory_space<vmem>>, vector<48x16xf32>,
      %cst_67 = arith.constant 0.314159274 : f32
      %89 = vector.broadcast %cst_67 : f32 to vector<48x1xf32>
      %90 = arith.mulf %79, %89 : vector<48x1xf32>
      %91 = math.cos %90 : vector<48x1xf32>
      %cst_68 = arith.constant 1.000000e+00 : f32
      %92 = vector.broadcast %cst_68 : f32 to vector<48x1xf32>
      %93 = arith.addf %91, %92 : vector<48x1xf32>
      %cst_69 = arith.constant 5.000000e-01 : f32
      %94 = vector.broadcast %cst_69 : f32 to vector<48x1xf32>
      %95 = arith.mulf %94, %93 : vector<48x1xf32>
      %cst_70 = arith.constant 1.000000e+01 : f32
      %96 = vector.broadcast %cst_70 : f32 to vector<48x1xf32>
      %97 = arith.cmpf ole, %79, %96 : vector<48x1xf32>
      %98 = arith.extui %97 : vector<48x1xi1> to vector<48x1xi32>
      %99 = arith.sitofp %98 : vector<48x1xi32> to vector<48x1xf32>
      %100 = arith.mulf %95, %99 : vector<48x1xf32>
      %c0_71 = arith.constant 0 : index
      %c0_72 = arith.constant 0 : index
      %101 = vector.load %arg23[%c0_71, %c0_72] : memref<48x1xf32, #tpu.memory_space<vmem>>, vector<48x1xf32>
      tpu.vector_store %arg23[%c0_71, %c0_72], %100 {strides = array<i32>} : memref<48x1xf32, #tpu.memory_space<vmem>>, vector<48x1xf32>,
      %c0_73 = arith.constant 0 : index
      %c0_74 = arith.constant 0 : index
      %102 = vector.load %arg3[%c0_73, %c0_74] : memref<16x32xf32, #tpu.memory_space<vmem>>, vector<16x32xf32>
      %c0_75 = arith.constant 0 : index
      %c0_76 = arith.constant 0 : index
      %103 = vector.load %arg21[%c0_75, %c0_76] : memref<16x32xf32, #tpu.memory_space<vmem>>, vector<16x32xf32>
      tpu.vector_store %arg21[%c0_75, %c0_76], %102 {strides = array<i32>} : memref<16x32xf32, #tpu.memory_space<vmem>>, vector<16x32xf32>,
    } else {
    }
    %c0 = arith.constant 0 : index
    %c0_1 = arith.constant 0 : index
    %3 = vector.load %arg21[%c0, %c0_1] : memref<16x32xf32, #tpu.memory_space<vmem>>, vector<16x32xf32>
    %c0_2 = arith.constant 0 : index
    %c0_3 = arith.constant 0 : index
    %4 = vector.load %arg22[%c0_2, %c0_3] : memref<48x16xf32, #tpu.memory_space<vmem>>, vector<48x16xf32>
    %5 = arith.truncf %4 : vector<48x16xf32> to vector<48x16xbf16>
    %c0_4 = arith.constant 0 : index
    %c0_5 = arith.constant 0 : index
    %c0_6 = arith.constant 0 : index
    %6 = vector.load %arg6[%c0_4, %c0_5, %c0_6] : memref<1x16x32xbf16, #tpu.memory_space<vmem>>, vector<1x16x32xbf16>
    %7 = vector.shape_cast %6 : vector<1x16x32xbf16> to vector<16x32xbf16>
    %cst = arith.constant dense<0.000000e+00> : vector<48x32xf32>
    %8 = tpu.matmul %5, %7, %cst {dimension_numbers = #tpu.dot_dimension_numbers<[1], [0], [0], [1], [0, 0, 1, 1], [], []>} : vector<48x16xbf16>, vector<16x32xbf16>, vector<48x32xf32> -> vector<48x32xf32>
    %c0_7 = arith.constant 0 : index
    %c0_8 = arith.constant 0 : index
    %c0_9 = arith.constant 0 : index
    %9 = vector.load %arg7[%c0_7, %c0_8, %c0_9] : memref<1x1x32xf32, #tpu.memory_space<vmem>>, vector<1x1x32xf32>
    %10 = vector.shape_cast %9 : vector<1x1x32xf32> to vector<1x32xf32>
    %11 = vector.broadcast %10 : vector<1x32xf32> to vector<48x32xf32>
    %12 = arith.addf %8, %11 : vector<48x32xf32>
    %cst_10 = arith.constant 0.000000e+00 : f32
    %13 = vector.broadcast %cst_10 : f32 to vector<48x32xf32>
    %14 = arith.maximumf %12, %13 : vector<48x32xf32>
    %15 = math.absf %12 : vector<48x32xf32>
    %cst_11 = arith.constant 0.000000e+00 : f32
    %16 = vector.broadcast %cst_11 : f32 to vector<48x32xf32>
    %17 = arith.subf %16, %15 : vector<48x32xf32>
    %18 = math.exp %17 : vector<48x32xf32>
    %cst_12 = arith.constant 1.000000e+00 : f32
    %19 = vector.broadcast %cst_12 : f32 to vector<48x32xf32>
    %20 = arith.addf %19, %18 : vector<48x32xf32>
    %21 = math.log %20 : vector<48x32xf32>
    %22 = arith.addf %14, %21 : vector<48x32xf32>
    %cst_13 = arith.constant 0.693147182 : f32
    %23 = vector.broadcast %cst_13 : f32 to vector<48x32xf32>
    %24 = arith.subf %22, %23 : vector<48x32xf32>
    %25 = arith.truncf %24 : vector<48x32xf32> to vector<48x32xbf16>
    %c0_14 = arith.constant 0 : index
    %c0_15 = arith.constant 0 : index
    %c0_16 = arith.constant 0 : index
    %26 = vector.load %arg8[%c0_14, %c0_15, %c0_16] : memref<1x32x32xbf16, #tpu.memory_space<vmem>>, vector<1x32x32xbf16>
    %27 = vector.shape_cast %26 : vector<1x32x32xbf16> to vector<32x32xbf16>
    %cst_17 = arith.constant dense<0.000000e+00> : vector<48x32xf32>
    %28 = tpu.matmul %25, %27, %cst_17 {dimension_numbers = #tpu.dot_dimension_numbers<[1], [0], [0], [1], [0, 0, 1, 1], [], []>} : vector<48x32xbf16>, vector<32x32xbf16>, vector<48x32xf32> -> vector<48x32xf32>
    %c0_18 = arith.constant 0 : index
    %c0_19 = arith.constant 0 : index
    %c0_20 = arith.constant 0 : index
    %29 = vector.load %arg9[%c0_18, %c0_19, %c0_20] : memref<1x1x32xf32, #tpu.memory_space<vmem>>, vector<1x1x32xf32>
    %30 = vector.shape_cast %29 : vector<1x1x32xf32> to vector<1x32xf32>
    %31 = vector.broadcast %30 : vector<1x32xf32> to vector<48x32xf32>
    %32 = arith.addf %28, %31 : vector<48x32xf32>
    %c0_21 = arith.constant 0 : index
    %c0_22 = arith.constant 0 : index
    %33 = vector.load %arg23[%c0_21, %c0_22] : memref<48x1xf32, #tpu.memory_space<vmem>>, vector<48x1xf32>
    %34 = vector.broadcast %33 : vector<48x1xf32> to vector<48x32xf32>
    %35 = arith.mulf %32, %34 : vector<48x32xf32>
    %c0_23 = arith.constant 0 : index
    %c0_24 = arith.constant 0 : index
    %36 = vector.load %arg25[%c0_23, %c0_24] : memref<48x32xf32, #tpu.memory_space<vmem>>, vector<48x32xf32>
    tpu.vector_store %arg25[%c0_23, %c0_24], %35 {strides = array<i32>} : memref<48x32xf32, #tpu.memory_space<vmem>>, vector<48x32xf32>,
    %37 = arith.truncf %3 : vector<16x32xf32> to vector<16x32xbf16>
    %c0_25 = arith.constant 0 : index
    %c0_26 = arith.constant 0 : index
    %c0_27 = arith.constant 0 : index
    %38 = vector.load %arg10[%c0_25, %c0_26, %c0_27] : memref<1x32x32xbf16, #tpu.memory_space<vmem>>, vector<1x32x32xbf16>
    %39 = vector.shape_cast %38 : vector<1x32x32xbf16> to vector<32x32xbf16>
    %cst_28 = arith.constant dense<0.000000e+00> : vector<16x32xf32>
    %40 = tpu.matmul %37, %39, %cst_28 {dimension_numbers = #tpu.dot_dimension_numbers<[1], [0], [0], [1], [0, 0, 1, 1], [], []>} : vector<16x32xbf16>, vector<32x32xbf16>, vector<16x32xf32> -> vector<16x32xf32>
    %c0_29 = arith.constant 0 : index
    %c0_30 = arith.constant 0 : index
    %41 = vector.load %arg24[%c0_29, %c0_30] : memref<16x32xf32, #tpu.memory_space<vmem>>, vector<16x32xf32>
    tpu.vector_store %arg24[%c0_29, %c0_30], %40 {strides = array<i32>} : memref<16x32xf32, #tpu.memory_space<vmem>>, vector<16x32xf32>,
    %cst_31 = arith.constant 0.000000e+00 : f32
    %42 = vector.broadcast %cst_31 : f32 to vector<16x32xf32>
    %c0_32 = arith.constant 0 : index
    %c0_33 = arith.constant 0 : index
    %43 = vector.load %arg26[%c0_32, %c0_33] : memref<16x32xf32, #tpu.memory_space<vmem>>, vector<16x32xf32>
    tpu.vector_store %arg26[%c0_32, %c0_33], %42 {strides = array<i32>} : memref<16x32xf32, #tpu.memory_space<vmem>>, vector<16x32xf32>,
    %c0_i32_34 = arith.constant 0 : i32
    %c48_i32 = arith.constant 48 : i32
    %44 = arith.addi %c0_i32_34, %c48_i32 : i32
    %c1_i32 = arith.constant 1 : i32
    scf.for %arg27 = %c0_i32_34 to %44 step %c1_i32  : i32 {
      %79 = arith.index_cast %arg27 : i32 to index
      %80 = memref.load %arg1[%79] : memref<48xi32, #tpu.memory_space<smem>>
      %81 = arith.index_cast %arg27 : i32 to index
      %82 = memref.load %arg2[%81] : memref<48xi32, #tpu.memory_space<smem>>
      %83 = arith.index_cast %80 : i32 to index
      %c0_60 = arith.constant 0 : index
      %84 = vector.load %arg24[%83, %c0_60] : memref<16x32xf32, #tpu.memory_space<vmem>>, vector<1x32xf32>
      %85 = arith.index_cast %arg27 : i32 to index
      %c0_61 = arith.constant 0 : index
      %86 = vector.load %arg25[%85, %c0_61] : memref<48x32xf32, #tpu.memory_space<vmem>>, vector<1x32xf32>
      %87 = arith.mulf %84, %86 : vector<1x32xf32>
      %88 = arith.index_cast %82 : i32 to index
      %c0_62 = arith.constant 0 : index
      %89 = vector.load %arg26[%88, %c0_62] : memref<16x32xf32, #tpu.memory_space<vmem>>, vector<1x32xf32>
      %90 = arith.addf %89, %87 : vector<1x32xf32>
      %91 = arith.index_cast %82 : i32 to index
      %c0_63 = arith.constant 0 : index
      %92 = vector.load %arg26[%91, %c0_63] : memref<16x32xf32, #tpu.memory_space<vmem>>, vector<1x32xf32>
      tpu.vector_store %arg26[%91, %c0_63], %90 {strides = array<i32>} : memref<16x32xf32, #tpu.memory_space<vmem>>, vector<1x32xf32>,
    }
    %c48_i32_35 = arith.constant 48 : i32
    %c0_36 = arith.constant 0 : index
    %c0_37 = arith.constant 0 : index
    %45 = vector.load %arg26[%c0_36, %c0_37] : memref<16x32xf32, #tpu.memory_space<vmem>>, vector<16x32xf32>
    %46 = arith.truncf %45 : vector<16x32xf32> to vector<16x32xbf16>
    %c0_38 = arith.constant 0 : index
    %c0_39 = arith.constant 0 : index
    %c0_40 = arith.constant 0 : index
    %47 = vector.load %arg11[%c0_38, %c0_39, %c0_40] : memref<1x32x32xbf16, #tpu.memory_space<vmem>>, vector<1x32x32xbf16>
    %48 = vector.shape_cast %47 : vector<1x32x32xbf16> to vector<32x32xbf16>
    %cst_41 = arith.constant dense<0.000000e+00> : vector<16x32xf32>
    %49 = tpu.matmul %46, %48, %cst_41 {dimension_numbers = #tpu.dot_dimension_numbers<[1], [0], [0], [1], [0, 0, 1, 1], [], []>} : vector<16x32xbf16>, vector<32x32xbf16>, vector<16x32xf32> -> vector<16x32xf32>
    %c0_42 = arith.constant 0 : index
    %c0_43 = arith.constant 0 : index
    %c0_44 = arith.constant 0 : index
    %50 = vector.load %arg12[%c0_42, %c0_43, %c0_44] : memref<1x1x32xf32, #tpu.memory_space<vmem>>, vector<1x1x32xf32>
    %51 = vector.shape_cast %50 : vector<1x1x32xf32> to vector<1x32xf32>
    %52 = vector.broadcast %51 : vector<1x32xf32> to vector<16x32xf32>
    %53 = arith.addf %49, %52 : vector<16x32xf32>
    %cst_45 = arith.constant 0.000000e+00 : f32
    %54 = vector.broadcast %cst_45 : f32 to vector<16x32xf32>
    %55 = arith.maximumf %53, %54 : vector<16x32xf32>
    %56 = math.absf %53 : vector<16x32xf32>
    %cst_46 = arith.constant 0.000000e+00 : f32
    %57 = vector.broadcast %cst_46 : f32 to vector<16x32xf32>
    %58 = arith.subf %57, %56 : vector<16x32xf32>
    %59 = math.exp %58 : vector<16x32xf32>
    %cst_47 = arith.constant 1.000000e+00 : f32
    %60 = vector.broadcast %cst_47 : f32 to vector<16x32xf32>
    %61 = arith.addf %60, %59 : vector<16x32xf32>
    %62 = math.log %61 : vector<16x32xf32>
    %63 = arith.addf %55, %62 : vector<16x32xf32>
    %cst_48 = arith.constant 0.693147182 : f32
    %64 = vector.broadcast %cst_48 : f32 to vector<16x32xf32>
    %65 = arith.subf %63, %64 : vector<16x32xf32>
    %66 = arith.truncf %65 : vector<16x32xf32> to vector<16x32xbf16>
    %c0_49 = arith.constant 0 : index
    %c0_50 = arith.constant 0 : index
    %c0_51 = arith.constant 0 : index
    %67 = vector.load %arg13[%c0_49, %c0_50, %c0_51] : memref<1x32x32xbf16, #tpu.memory_space<vmem>>, vector<1x32x32xbf16>
    %68 = vector.shape_cast %67 : vector<1x32x32xbf16> to vector<32x32xbf16>
    %cst_52 = arith.constant dense<0.000000e+00> : vector<16x32xf32>
    %69 = tpu.matmul %66, %68, %cst_52 {dimension_numbers = #tpu.dot_dimension_numbers<[1], [0], [0], [1], [0, 0, 1, 1], [], []>} : vector<16x32xbf16>, vector<32x32xbf16>, vector<16x32xf32> -> vector<16x32xf32>
    %c0_53 = arith.constant 0 : index
    %c0_54 = arith.constant 0 : index
    %c0_55 = arith.constant 0 : index
    %70 = vector.load %arg14[%c0_53, %c0_54, %c0_55] : memref<1x1x32xf32, #tpu.memory_space<vmem>>, vector<1x1x32xf32>
    %71 = vector.shape_cast %70 : vector<1x1x32xf32> to vector<1x32xf32>
    %72 = vector.broadcast %71 : vector<1x32xf32> to vector<16x32xf32>
    %73 = arith.addf %69, %72 : vector<16x32xf32>
    %74 = arith.addf %3, %73 : vector<16x32xf32>
    %c0_56 = arith.constant 0 : index
    %c0_57 = arith.constant 0 : index
    %75 = vector.load %arg21[%c0_56, %c0_57] : memref<16x32xf32, #tpu.memory_space<vmem>>, vector<16x32xf32>
    tpu.vector_store %arg21[%c0_56, %c0_57], %74 {strides = array<i32>} : memref<16x32xf32, #tpu.memory_space<vmem>>, vector<16x32xf32>,
    %c1_i32_58 = arith.constant 1 : i32
    %76 = arith.cmpi eq, %arg0, %c1_i32_58 : i32
    %77 = arith.extui %76 : i1 to i32
    %c0_i32_59 = arith.constant 0 : i32
    %78 = arith.cmpi ne, %77, %c0_i32_59 : i32
    scf.if %78 {
      %c0_60 = arith.constant 0 : index
      %c0_61 = arith.constant 0 : index
      %79 = vector.load %arg21[%c0_60, %c0_61] : memref<16x32xf32, #tpu.memory_space<vmem>>, vector<16x32xf32>
      %80 = arith.truncf %79 : vector<16x32xf32> to vector<16x32xbf16>
      %c0_62 = arith.constant 0 : index
      %c0_63 = arith.constant 0 : index
      %81 = vector.load %arg15[%c0_62, %c0_63] : memref<32x16xbf16, #tpu.memory_space<vmem>>, vector<32x16xbf16>
      %cst_64 = arith.constant dense<0.000000e+00> : vector<16x16xf32>
      %82 = tpu.matmul %80, %81, %cst_64 {dimension_numbers = #tpu.dot_dimension_numbers<[1], [0], [0], [1], [0, 0, 1, 1], [], []>} : vector<16x32xbf16>, vector<32x16xbf16>, vector<16x16xf32> -> vector<16x16xf32>
      %c0_65 = arith.constant 0 : index
      %c0_66 = arith.constant 0 : index
      %83 = vector.load %arg16[%c0_65, %c0_66] : memref<1x16xf32, #tpu.memory_space<vmem>>, vector<1x16xf32>
      %84 = vector.broadcast %83 : vector<1x16xf32> to vector<16x16xf32>
      %85 = arith.addf %82, %84 : vector<16x16xf32>
      %cst_67 = arith.constant 0.000000e+00 : f32
      %86 = vector.broadcast %cst_67 : f32 to vector<16x16xf32>
      %87 = arith.maximumf %85, %86 : vector<16x16xf32>
      %88 = math.absf %85 : vector<16x16xf32>
      %cst_68 = arith.constant 0.000000e+00 : f32
      %89 = vector.broadcast %cst_68 : f32 to vector<16x16xf32>
      %90 = arith.subf %89, %88 : vector<16x16xf32>
      %91 = math.exp %90 : vector<16x16xf32>
      %cst_69 = arith.constant 1.000000e+00 : f32
      %92 = vector.broadcast %cst_69 : f32 to vector<16x16xf32>
      %93 = arith.addf %92, %91 : vector<16x16xf32>
      %94 = math.log %93 : vector<16x16xf32>
      %95 = arith.addf %87, %94 : vector<16x16xf32>
      %cst_70 = arith.constant 0.693147182 : f32
      %96 = vector.broadcast %cst_70 : f32 to vector<16x16xf32>
      %97 = arith.subf %95, %96 : vector<16x16xf32>
      %98 = arith.truncf %97 : vector<16x16xf32> to vector<16x16xbf16>
      %c0_71 = arith.constant 0 : index
      %c0_72 = arith.constant 0 : index
      %99 = vector.load %arg17[%c0_71, %c0_72] : memref<16x1xbf16, #tpu.memory_space<vmem>>, vector<16x1xbf16>
      %cst_73 = arith.constant dense<0.000000e+00> : vector<16x1xf32>
      %100 = tpu.matmul %98, %99, %cst_73 {dimension_numbers = #tpu.dot_dimension_numbers<[1], [0], [0], [1], [0, 0, 1, 1], [], []>} : vector<16x16xbf16>, vector<16x1xbf16>, vector<16x1xf32> -> vector<16x1xf32>
      %c0_74 = arith.constant 0 : index
      %c0_75 = arith.constant 0 : index
      %101 = vector.load %arg18[%c0_74, %c0_75] : memref<1x1xf32, #tpu.memory_space<vmem>>, vector<1x1xf32>
      %102 = vector.broadcast %101 : vector<1x1xf32> to vector<16x1xf32>
      %103 = arith.addf %100, %102 : vector<16x1xf32>
      %c0_76 = arith.constant 0 : index
      %c0_77 = arith.constant 0 : index
      %104 = vector.load %arg19[%c0_76, %c0_77] : memref<2x16xf32, #tpu.memory_space<vmem>>, vector<2x16xf32>
      %cst_78 = arith.constant dense<0.000000e+00> : vector<2x1xf32>
      %105 = tpu.matmul %104, %103, %cst_78 {dimension_numbers = #tpu.dot_dimension_numbers<[1], [0], [0], [1], [0, 0, 1, 1], [], []>} : vector<2x16xf32>, vector<16x1xf32>, vector<2x1xf32> -> vector<2x1xf32>
      %c0_79 = arith.constant 0 : index
      %c0_80 = arith.constant 0 : index
      %106 = vector.load %arg20[%c0_79, %c0_80] : memref<2x1xf32, #tpu.memory_space<vmem>>, vector<2x1xf32>
      tpu.vector_store %arg20[%c0_79, %c0_80], %105 {strides = array<i32>} : memref<2x1xf32, #tpu.memory_space<vmem>>, vector<2x1xf32>,
    } else {
    }
    return
  }
  func.func @transform_0(%arg0: i32, %arg1: memref<48xi32, #tpu.memory_space<smem>>, %arg2: memref<48xi32, #tpu.memory_space<smem>>) -> (i32, i32) {
    %c0_i32 = arith.constant 0 : i32
    %c0_i32_0 = arith.constant 0 : i32
    %c0_i32_1 = arith.constant 0 : i32
    return %c0_i32, %c0_i32_0 : i32, i32
  }
  func.func @transform_1(%arg0: i32, %arg1: memref<48xi32, #tpu.memory_space<smem>>, %arg2: memref<48xi32, #tpu.memory_space<smem>>) -> (i32, i32) {
    %c0_i32 = arith.constant 0 : i32
    %c0_i32_0 = arith.constant 0 : i32
    %c0_i32_1 = arith.constant 0 : i32
    return %c0_i32, %c0_i32_0 : i32, i32
  }
  func.func @transform_2(%arg0: i32, %arg1: memref<48xi32, #tpu.memory_space<smem>>, %arg2: memref<48xi32, #tpu.memory_space<smem>>) -> (i32, i32) {
    %c0_i32 = arith.constant 0 : i32
    %c0_i32_0 = arith.constant 0 : i32
    %c0_i32_1 = arith.constant 0 : i32
    return %c0_i32, %c0_i32_0 : i32, i32
  }
  func.func @transform_3(%arg0: i32, %arg1: memref<48xi32, #tpu.memory_space<smem>>, %arg2: memref<48xi32, #tpu.memory_space<smem>>) -> (i32, i32, i32) {
    %c0_i32 = arith.constant 0 : i32
    %c0_i32_0 = arith.constant 0 : i32
    %c0_i32_1 = arith.constant 0 : i32
    return %arg0, %c0_i32, %c0_i32_0 : i32, i32, i32
  }
  func.func @transform_4(%arg0: i32, %arg1: memref<48xi32, #tpu.memory_space<smem>>, %arg2: memref<48xi32, #tpu.memory_space<smem>>) -> (i32, i32, i32) {
    %c0_i32 = arith.constant 0 : i32
    %c0_i32_0 = arith.constant 0 : i32
    %c0_i32_1 = arith.constant 0 : i32
    return %arg0, %c0_i32, %c0_i32_0 : i32, i32, i32
  }
  func.func @transform_5(%arg0: i32, %arg1: memref<48xi32, #tpu.memory_space<smem>>, %arg2: memref<48xi32, #tpu.memory_space<smem>>) -> (i32, i32, i32) {
    %c0_i32 = arith.constant 0 : i32
    %c0_i32_0 = arith.constant 0 : i32
    %c0_i32_1 = arith.constant 0 : i32
    return %arg0, %c0_i32, %c0_i32_0 : i32, i32, i32
  }
  func.func @transform_6(%arg0: i32, %arg1: memref<48xi32, #tpu.memory_space<smem>>, %arg2: memref<48xi32, #tpu.memory_space<smem>>) -> (i32, i32, i32) {
    %c0_i32 = arith.constant 0 : i32
    %c0_i32_0 = arith.constant 0 : i32
    %c0_i32_1 = arith.constant 0 : i32
    return %arg0, %c0_i32, %c0_i32_0 : i32, i32, i32
  }
  func.func @transform_7(%arg0: i32, %arg1: memref<48xi32, #tpu.memory_space<smem>>, %arg2: memref<48xi32, #tpu.memory_space<smem>>) -> (i32, i32, i32) {
    %c0_i32 = arith.constant 0 : i32
    %c0_i32_0 = arith.constant 0 : i32
    %c0_i32_1 = arith.constant 0 : i32
    return %arg0, %c0_i32, %c0_i32_0 : i32, i32, i32
  }
  func.func @transform_8(%arg0: i32, %arg1: memref<48xi32, #tpu.memory_space<smem>>, %arg2: memref<48xi32, #tpu.memory_space<smem>>) -> (i32, i32, i32) {
    %c0_i32 = arith.constant 0 : i32
    %c0_i32_0 = arith.constant 0 : i32
    %c0_i32_1 = arith.constant 0 : i32
    return %arg0, %c0_i32, %c0_i32_0 : i32, i32, i32
  }
  func.func @transform_9(%arg0: i32, %arg1: memref<48xi32, #tpu.memory_space<smem>>, %arg2: memref<48xi32, #tpu.memory_space<smem>>) -> (i32, i32, i32) {
    %c0_i32 = arith.constant 0 : i32
    %c0_i32_0 = arith.constant 0 : i32
    %c0_i32_1 = arith.constant 0 : i32
    return %arg0, %c0_i32, %c0_i32_0 : i32, i32, i32
  }
  func.func @transform_10(%arg0: i32, %arg1: memref<48xi32, #tpu.memory_space<smem>>, %arg2: memref<48xi32, #tpu.memory_space<smem>>) -> (i32, i32, i32) {
    %c0_i32 = arith.constant 0 : i32
    %c0_i32_0 = arith.constant 0 : i32
    %c0_i32_1 = arith.constant 0 : i32
    return %arg0, %c0_i32, %c0_i32_0 : i32, i32, i32
  }
  func.func @transform_11(%arg0: i32, %arg1: memref<48xi32, #tpu.memory_space<smem>>, %arg2: memref<48xi32, #tpu.memory_space<smem>>) -> (i32, i32, i32) {
    %c0_i32 = arith.constant 0 : i32
    %c0_i32_0 = arith.constant 0 : i32
    %c0_i32_1 = arith.constant 0 : i32
    return %arg0, %c0_i32, %c0_i32_0 : i32, i32, i32
  }
  func.func @transform_12(%arg0: i32, %arg1: memref<48xi32, #tpu.memory_space<smem>>, %arg2: memref<48xi32, #tpu.memory_space<smem>>) -> (i32, i32) {
    %c0_i32 = arith.constant 0 : i32
    %c0_i32_0 = arith.constant 0 : i32
    %c0_i32_1 = arith.constant 0 : i32
    return %c0_i32, %c0_i32_0 : i32, i32
  }
  func.func @transform_13(%arg0: i32, %arg1: memref<48xi32, #tpu.memory_space<smem>>, %arg2: memref<48xi32, #tpu.memory_space<smem>>) -> (i32, i32) {
    %c0_i32 = arith.constant 0 : i32
    %c0_i32_0 = arith.constant 0 : i32
    %c0_i32_1 = arith.constant 0 : i32
    return %c0_i32, %c0_i32_0 : i32, i32
  }
  func.func @transform_14(%arg0: i32, %arg1: memref<48xi32, #tpu.memory_space<smem>>, %arg2: memref<48xi32, #tpu.memory_space<smem>>) -> (i32, i32) {
    %c0_i32 = arith.constant 0 : i32
    %c0_i32_0 = arith.constant 0 : i32
    %c0_i32_1 = arith.constant 0 : i32
    return %c0_i32, %c0_i32_0 : i32, i32
  }
  func.func @transform_15(%arg0: i32, %arg1: memref<48xi32, #tpu.memory_space<smem>>, %arg2: memref<48xi32, #tpu.memory_space<smem>>) -> (i32, i32) {
    %c0_i32 = arith.constant 0 : i32
    %c0_i32_0 = arith.constant 0 : i32
    %c0_i32_1 = arith.constant 0 : i32
    return %c0_i32, %c0_i32_0 : i32, i32
  }
  func.func @transform_16(%arg0: i32, %arg1: memref<48xi32, #tpu.memory_space<smem>>, %arg2: memref<48xi32, #tpu.memory_space<smem>>) -> (i32, i32) {
    %c0_i32 = arith.constant 0 : i32
    %c0_i32_0 = arith.constant 0 : i32
    %c0_i32_1 = arith.constant 0 : i32
    return %c0_i32, %c0_i32_0 : i32, i32
  }
  func.func @transform_17(%arg0: i32, %arg1: memref<48xi32, #tpu.memory_space<smem>>, %arg2: memref<48xi32, #tpu.memory_space<smem>>) -> (i32, i32) {
    %c0_i32 = arith.constant 0 : i32
    %c0_i32_0 = arith.constant 0 : i32
    %c0_i32_1 = arith.constant 0 : i32
    return %c0_i32, %c0_i32_0 : i32, i32
  }
}

</mosaic_0001>

<llo_original>
// kernel: tpu_custom_call.1
$region0: #{tpu_custom_call.1}
  #allocation0 [shape = 'u32[]', space=smem, size = 0x4, offset = 0x4, fixed_abs, tag = 'smem constant byte address 0x4 - core index']
  #allocation1 [shape = 'u32[144,128]{1,0:T(1,128)}', space=vmem, size = 0x12000, scoped, tag = 'internal scratch']
  #allocation2 [shape = 'f32[16,32]{1,0:T(8,128)}', space=vmem, size = 0x2000, scoped, tag = 'scratch operand']
  #allocation3 [shape = 'f32[48,16]{1,0:T(8,128)}', space=vmem, size = 0x6000, scoped, tag = 'scratch operand']
  #allocation4 [shape = 'f32[48,1]{1,0:T(8,128)}', space=vmem, size = 0x6000, scoped, tag = 'scratch operand']
  #allocation5 [shape = 'f32[16,32]{1,0:T(8,128)}', space=vmem, size = 0x2000, scoped, tag = 'scratch operand']
  #allocation6 [shape = 'f32[48,32]{1,0:T(8,128)}', space=vmem, size = 0x6000, scoped, tag = 'scratch operand']
  #allocation7 [shape = 'f32[16,32]{1,0:T(8,128)}', space=vmem, size = 0x2000, scoped, tag = 'scratch operand']
  #allocation8 [shape = 's32[1]{0}', space=sflag, size = 0x4, scoped, tag = 'scoped memory for tpu_custom_call.1']
  #allocation9 [shape = 'u8[512]{0}', space=smem, size = 0x200, scoped, tag = 'prefetched SMEM operand 0']
  #allocation10 [shape = 'u8[512]{0}', space=smem, size = 0x200, scoped, tag = 'prefetched SMEM operand 1']
  #allocation11 [shape = 'f32[1,1]{1,0:T(1,128)S(1)}', space=vmem, size = 0x200, scoped, tag = 'scoped memory for tpu_custom_call.1']
  %s0 = inlined_call_operand.hbm [shape: s32[48], index: 0, kind: input, shape index: {}]
  %s1 = inlined_call_operand.hbm [shape: s32[48], index: 1, kind: input, shape index: {}]
  %s2 = inlined_call_operand.hbm [shape: f32[16,32], index: 2, kind: input, shape index: {}]
  %s3 = inlined_call_operand.vmem [shape: f32[48,1], index: 3, kind: input, shape index: {}]
  %s4 = inlined_call_operand.hbm [shape: f32[1,16], index: 4, kind: input, shape index: {}]
  %s5 = inlined_call_operand.hbm [shape: bf16[2,16,32], index: 5, kind: input, shape index: {}]
  %s6 = inlined_call_operand.hbm [shape: f32[2,1,32], index: 6, kind: input, shape index: {}]
  %s7 = inlined_call_operand.vmem [shape: bf16[2,32,32], index: 7, kind: input, shape index: {}]
  %s8 = inlined_call_operand.hbm [shape: f32[2,1,32], index: 8, kind: input, shape index: {}]
  %s9 = inlined_call_operand.vmem [shape: bf16[2,32,32], index: 9, kind: input, shape index: {}]
  %s10 = inlined_call_operand.vmem [shape: bf16[2,32,32], index: 10, kind: input, shape index: {}]
  %s11 = inlined_call_operand.hbm [shape: f32[2,1,32], index: 11, kind: input, shape index: {}]
  %s12 = inlined_call_operand.hbm [shape: bf16[2,32,32], index: 12, kind: input, shape index: {}]
  %s13 = inlined_call_operand.vmem [shape: f32[2,1,32], index: 13, kind: input, shape index: {}]
  %s14 = inlined_call_operand.vmem [shape: bf16[32,16], index: 14, kind: input, shape index: {}]
  %s15 = inlined_call_operand.vmem [shape: f32[1,16], index: 15, kind: input, shape index: {}]
  %s16 = inlined_call_operand.vmem [shape: bf16[16,1], index: 16, kind: input, shape index: {}]
  %s17 = inlined_call_operand.<no memory space> [shape: f32[1,1], index: 17, kind: input, shape index: {}]
  %s18 = inlined_call_operand.vmem [shape: f32[2,16], index: 18, kind: input, shape index: {}]
  %s19 = inlined_call_operand.vmem [shape: f32[2,1], index: 19, kind: output, shape index: {}]
  %s20 = sld [smem:[#allocation0]]
  $region144: #{tpu_custom_call.1} parent=0
    _
  %s22 = ssub.s32 1, %s20
  %s23 = scalar_select 0, %s22, %s20
  %25 = dma.hbm_to_smem %s0, 16, [#allocation9], [#allocation8]
  %27 = dma.hbm_to_smem %s1, 16, [#allocation10], [#allocation8]
  %v28 = vstv %s17
  %29 = vst [vmem:[#allocation11] sm:$0x1] %v28
  %30 = dma.done [#allocation8], 32
  %31 = sfence
  $region1: #{tpu_custom_call.1} parent=0
    #allocation12 [shape = 'u8[8192]{0}', space=vmem, size = 0x2000, scoped, tag = 'input window, operand 2, single buffered']
    #allocation13 [shape = 's32[2]{0}', space=sflag, size = 0x8, scoped, tag = 'scoped memory for tpu_custom_call.1']
    #allocation14 [shape = 'u8[512]{0}', space=vmem, size = 0x400, scoped, tag = 'input window, operand 4, single buffered']
    #allocation15 [shape = 's32[1]{0}', space=sflag, size = 0x4, scoped, tag = 'scoped memory for tpu_custom_call.1']
    #allocation16 [shape = 'u8[8192]{0}', space=vmem, size = 0x2000, scoped, tag = 'input window, operand 5']
    #allocation17 [shape = 'u8[1024]{0}', space=vmem, size = 0x400, scoped, tag = 'input window, operand 6']
    #allocation18 [shape = 'u8[1024]{0}', space=vmem, size = 0x400, scoped, tag = 'input window, operand 8']
    #allocation19 [shape = 'u8[1024]{0}', space=vmem, size = 0x400, scoped, tag = 'input window, operand 11']
    #allocation20 [shape = 'u8[16384]{0}', space=vmem, size = 0x4000, scoped, tag = 'input window, operand 12']
    %32 = vsyncpa [#allocation13], 0
    %33 = vsyncpa [#allocation15], 0
    loop: start=0, step=1, limit=4
    $region2: #{tpu_custom_call.1} parent=1 // loop_pre_header
      _
    $region3: #{tpu_custom_call.1} parent=1 // loop_header
      %s35 = sphi 0, %s39
      %p36 = scmp.ge.s32.totalorder %s35, 4
      %s43 = sphi 0, %s43
      %s45 = sphi 0, %s43
      %s46 = sphi 0, %s45
      %s60 = sphi 0, %s46
      %s64 = sphi 0, %s64
      %s66 = sphi 0, %s64
      %s67 = sphi 0, %s66
      %s81 = sphi 0, %s67
      %s85 = sphi 0, %s85
      %s87 = sphi 0, %s85
      %s88 = sphi 0, %s87
      %s102 = sphi 0, %s88
      %s108 = sphi 0, %s110
      %s111 = sphi 0, %s108
      %s112 = sphi 0, %s111
      %s128 = sphi 0, %s112
      %s134 = sphi 0, %s136
      %s137 = sphi 0, %s134
      %s138 = sphi 0, %s137
      %s154 = sphi 0, %s138
      %s160 = sphi 0, %s162
      %s163 = sphi 0, %s160
      %s164 = sphi 0, %s163
      %s180 = sphi 0, %s164
      %s186 = sphi 0, %s188
      %s189 = sphi 0, %s186
      %s190 = sphi 0, %s189
      %s206 = sphi 0, %s190
      %s212 = sphi 0, %s214
      %s215 = sphi 0, %s212
      %s216 = sphi 0, %s215
      %s232 = sphi 0, %s216
      %s238 = sphi 0, %s240
      %s241 = sphi 0, %s238
      %s242 = sphi 0, %s241
      %s258 = sphi 0, %s242
      %s264 = sphi 0, %s266
      %s267 = sphi 0, %s264
      %s268 = sphi 0, %s267
      %s284 = sphi 0, %s268
      %s290 = sphi 0, %s292
      %s293 = sphi 0, %s290
      %s294 = sphi 0, %s293
      %s310 = sphi 0, %s294
      %s316 = sphi 0, %s318
      %s319 = sphi 0, %s316
      %s320 = sphi 0, %s319
      %s336 = sphi 0, %s320
      %s340 = sphi 0, %s340
      %s342 = sphi 0, %s340
      %s343 = sphi 0, %s342
      %s357 = sphi 0, %s343
      %s361 = sphi 0, %s361
      %s363 = sphi 0, %s361
      %s364 = sphi 0, %s363
      %s378 = sphi 0, %s364
      %s382 = sphi 0, %s382
      %s384 = sphi 0, %s382
      %s385 = sphi 0, %s384
      %s399 = sphi 0, %s385
      %s403 = sphi 0, %s403
      %s405 = sphi 0, %s403
      %s406 = sphi 0, %s405
      %s420 = sphi 0, %s406
      %s424 = sphi 0, %s424
      %s426 = sphi 0, %s424
      %s427 = sphi 0, %s426
      %s441 = sphi 0, %s427
      %s445 = sphi 0, %s445
      %s447 = sphi 0, %s445
      %s448 = sphi 0, %s447
      %s462 = sphi 0, %s448
    $region4: #{tpu_custom_call.1} parent=1 // loop_header_branch
      %38 = sbr.rel (%p36) target = $region8
    $region5: #{tpu_custom_call.1} parent=1 // loop_body
      %s40 = ssub.s32 %s35, 1
      %s41 = ssub.s32 %s35, 2
      %s42 = sadd.s32 %s35, 1
      %s44 = sadd.s32 %s43, 1
      %p47 = scmp.eq.s32.totalorder %s35, 1
      %p48 = scmp.ne.s32.totalorder %s43, %s45
      %p49 = scmp.eq.s32.totalorder %s35, 0
      %p50 = por %p48, %p49
      %p51 = scmp.ne.s32.totalorder %s43, %s45
      %p52 = scmp.eq.s32.totalorder %s40, 1
      %p53 = por %p51, %p52
      %p54 = scmp.ne.s32.totalorder %s45, %s46
      %p55 = scmp.eq.s32.totalorder %s40, 0
      %p56 = por %p54, %p55
      %p57 = scmp.ne.s32.totalorder %s45, %s46
      %p58 = scmp.eq.s32.totalorder %s41, 1
      %p59 = por %p57, %p58
      %p61 = scmp.ne.s32.totalorder %s46, %s60
      %p62 = scmp.eq.s32.totalorder %s41, 0
      %p63 = por %p61, %p62
      %s65 = sadd.s32 %s64, 1
      %p68 = scmp.eq.s32.totalorder %s35, 1
      %p69 = scmp.ne.s32.totalorder %s64, %s66
      %p70 = scmp.eq.s32.totalorder %s35, 0
      %p71 = por %p69, %p70
      %p72 = scmp.ne.s32.totalorder %s64, %s66
      %p73 = scmp.eq.s32.totalorder %s40, 1
      %p74 = por %p72, %p73
      %p75 = scmp.ne.s32.totalorder %s66, %s67
      %p76 = scmp.eq.s32.totalorder %s40, 0
      %p77 = por %p75, %p76
      %p78 = scmp.ne.s32.totalorder %s66, %s67
      %p79 = scmp.eq.s32.totalorder %s41, 1
      %p80 = por %p78, %p79
      %p82 = scmp.ne.s32.totalorder %s67, %s81
      %p83 = scmp.eq.s32.totalorder %s41, 0
      %p84 = por %p82, %p83
      %s86 = sadd.s32 %s85, 1
      %p89 = scmp.eq.s32.totalorder %s35, 1
      %p90 = scmp.ne.s32.totalorder %s85, %s87
      %p91 = scmp.eq.s32.totalorder %s35, 0
      %p92 = por %p90, %p91
      %p93 = scmp.ne.s32.totalorder %s85, %s87
      %p94 = scmp.eq.s32.totalorder %s40, 1
      %p95 = por %p93, %p94
      %p96 = scmp.ne.s32.totalorder %s87, %s88
      %p97 = scmp.eq.s32.totalorder %s40, 0
      %p98 = por %p96, %p97
      %p99 = scmp.ne.s32.totalorder %s87, %s88
      %p100 = scmp.eq.s32.totalorder %s41, 1
      %p101 = por %p99, %p100
      %p103 = scmp.ne.s32.totalorder %s88, %s102
      %p104 = scmp.eq.s32.totalorder %s41, 0
      %p105 = por %p103, %p104
      %s106 = ssub.s32 %s35, %s42
      %p107 = scmp.eq.s32.totalorder %s106, 0
      %s109 = sadd.s32 %s108, 1
      %s110 = scalar_select %p107, %s108, %s109
      %p113 = pneg %p107
      %p114 = scmp.eq.s32.totalorder %s35, 1
      %p115 = por %p113, %p114
      %p116 = scmp.ne.s32.totalorder %s108, %s111
      %p117 = scmp.eq.s32.totalorder %s35, 0
      %p118 = por %p116, %p117
      %p119 = scmp.ne.s32.totalorder %s108, %s111
      %p120 = scmp.eq.s32.totalorder %s40, 1
      %p121 = por %p119, %p120
      %p122 = scmp.ne.s32.totalorder %s111, %s112
      %p123 = scmp.eq.s32.totalorder %s40, 0
      %p124 = por %p122, %p123
      %p125 = scmp.ne.s32.totalorder %s111, %s112
      %p126 = scmp.eq.s32.totalorder %s41, 1
      %p127 = por %p125, %p126
      %p129 = scmp.ne.s32.totalorder %s112, %s128
      %p130 = scmp.eq.s32.totalorder %s41, 0
      %p131 = por %p129, %p130
      %s132 = ssub.s32 %s35, %s42
      %p133 = scmp.eq.s32.totalorder %s132, 0
      %s135 = sadd.s32 %s134, 1
      %s136 = scalar_select %p133, %s134, %s135
      %p139 = pneg %p133
      %p140 = scmp.eq.s32.totalorder %s35, 1
      %p141 = por %p139, %p140
      %p142 = scmp.ne.s32.totalorder %s134, %s137
      %p143 = scmp.eq.s32.totalorder %s35, 0
      %p144 = por %p142, %p143
      %p145 = scmp.ne.s32.totalorder %s134, %s137
      %p146 = scmp.eq.s32.totalorder %s40, 1
      %p147 = por %p145, %p146
      %p148 = scmp.ne.s32.totalorder %s137, %s138
      %p149 = scmp.eq.s32.totalorder %s40, 0
      %p150 = por %p148, %p149
      %p151 = scmp.ne.s32.totalorder %s137, %s138
      %p152 = scmp.eq.s32.totalorder %s41, 1
      %p153 = por %p151, %p152
      %p155 = scmp.ne.s32.totalorder %s138, %s154
      %p156 = scmp.eq.s32.totalorder %s41, 0
      %p157 = por %p155, %p156
      %s158 = ssub.s32 %s35, %s42
      %p159 = scmp.eq.s32.totalorder %s158, 0
      %s161 = sadd.s32 %s160, 1
      %s162 = scalar_select %p159, %s160, %s161
      %p165 = pneg %p159
      %p166 = scmp.eq.s32.totalorder %s35, 1
      %p167 = por %p165, %p166
      %p168 = scmp.ne.s32.totalorder %s160, %s163
      %p169 = scmp.eq.s32.totalorder %s35, 0
      %p170 = por %p168, %p169
      %p171 = scmp.ne.s32.totalorder %s160, %s163
      %p172 = scmp.eq.s32.totalorder %s40, 1
      %p173 = por %p171, %p172
      %p174 = scmp.ne.s32.totalorder %s163, %s164
      %p175 = scmp.eq.s32.totalorder %s40, 0
      %p176 = por %p174, %p175
      %p177 = scmp.ne.s32.totalorder %s163, %s164
      %p178 = scmp.eq.s32.totalorder %s41, 1
      %p179 = por %p177, %p178
      %p181 = scmp.ne.s32.totalorder %s164, %s180
      %p182 = scmp.eq.s32.totalorder %s41, 0
      %p183 = por %p181, %p182
      %s184 = ssub.s32 %s35, %s42
      %p185 = scmp.eq.s32.totalorder %s184, 0
      %s187 = sadd.s32 %s186, 1
      %s188 = scalar_select %p185, %s186, %s187
      %p191 = pneg %p185
      %p192 = scmp.eq.s32.totalorder %s35, 1
      %p193 = por %p191, %p192
      %p194 = scmp.ne.s32.totalorder %s186, %s189
      %p195 = scmp.eq.s32.totalorder %s35, 0
      %p196 = por %p194, %p195
      %p197 = scmp.ne.s32.totalorder %s186, %s189
      %p198 = scmp.eq.s32.totalorder %s40, 1
      %p199 = por %p197, %p198
      %p200 = scmp.ne.s32.totalorder %s189, %s190
      %p201 = scmp.eq.s32.totalorder %s40, 0
      %p202 = por %p200, %p201
      %p203 = scmp.ne.s32.totalorder %s189, %s190
      %p204 = scmp.eq.s32.totalorder %s41, 1
      %p205 = por %p203, %p204
      %p207 = scmp.ne.s32.totalorder %s190, %s206
      %p208 = scmp.eq.s32.totalorder %s41, 0
      %p209 = por %p207, %p208
      %s210 = ssub.s32 %s35, %s42
      %p211 = scmp.eq.s32.totalorder %s210, 0
      %s213 = sadd.s32 %s212, 1
      %s214 = scalar_select %p211, %s212, %s213
      %p217 = pneg %p211
      %p218 = scmp.eq.s32.totalorder %s35, 1
      %p219 = por %p217, %p218
      %p220 = scmp.ne.s32.totalorder %s212, %s215
      %p221 = scmp.eq.s32.totalorder %s35, 0
      %p222 = por %p220, %p221
      %p223 = scmp.ne.s32.totalorder %s212, %s215
      %p224 = scmp.eq.s32.totalorder %s40, 1
      %p225 = por %p223, %p224
      %p226 = scmp.ne.s32.totalorder %s215, %s216
      %p227 = scmp.eq.s32.totalorder %s40, 0
      %p228 = por %p226, %p227
      %p229 = scmp.ne.s32.totalorder %s215, %s216
      %p230 = scmp.eq.s32.totalorder %s41, 1
      %p231 = por %p229, %p230
      %p233 = scmp.ne.s32.totalorder %s216, %s232
      %p234 = scmp.eq.s32.totalorder %s41, 0
      %p235 = por %p233, %p234
      %s236 = ssub.s32 %s35, %s42
      %p237 = scmp.eq.s32.totalorder %s236, 0
      %s239 = sadd.s32 %s238, 1
      %s240 = scalar_select %p237, %s238, %s239
      %p243 = pneg %p237
      %p244 = scmp.eq.s32.totalorder %s35, 1
      %p245 = por %p243, %p244
      %p246 = scmp.ne.s32.totalorder %s238, %s241
      %p247 = scmp.eq.s32.totalorder %s35, 0
      %p248 = por %p246, %p247
      %p249 = scmp.ne.s32.totalorder %s238, %s241
      %p250 = scmp.eq.s32.totalorder %s40, 1
      %p251 = por %p249, %p250
      %p252 = scmp.ne.s32.totalorder %s241, %s242
      %p253 = scmp.eq.s32.totalorder %s40, 0
      %p254 = por %p252, %p253
      %p255 = scmp.ne.s32.totalorder %s241, %s242
      %p256 = scmp.eq.s32.totalorder %s41, 1
      %p257 = por %p255, %p256
      %p259 = scmp.ne.s32.totalorder %s242, %s258
      %p260 = scmp.eq.s32.totalorder %s41, 0
      %p261 = por %p259, %p260
      %s262 = ssub.s32 %s35, %s42
      %p263 = scmp.eq.s32.totalorder %s262, 0
      %s265 = sadd.s32 %s264, 1
      %s266 = scalar_select %p263, %s264, %s265
      %p269 = pneg %p263
      %p270 = scmp.eq.s32.totalorder %s35, 1
      %p271 = por %p269, %p270
      %p272 = scmp.ne.s32.totalorder %s264, %s267
      %p273 = scmp.eq.s32.totalorder %s35, 0
      %p274 = por %p272, %p273
      %p275 = scmp.ne.s32.totalorder %s264, %s267
      %p276 = scmp.eq.s32.totalorder %s40, 1
      %p277 = por %p275, %p276
      %p278 = scmp.ne.s32.totalorder %s267, %s268
      %p279 = scmp.eq.s32.totalorder %s40, 0
      %p280 = por %p278, %p279
      %p281 = scmp.ne.s32.totalorder %s267, %s268
      %p282 = scmp.eq.s32.totalorder %s41, 1
      %p283 = por %p281, %p282
      %p285 = scmp.ne.s32.totalorder %s268, %s284
      %p286 = scmp.eq.s32.totalorder %s41, 0
      %p287 = por %p285, %p286
      %s288 = ssub.s32 %s35, %s42
      %p289 = scmp.eq.s32.totalorder %s288, 0
      %s291 = sadd.s32 %s290, 1
      %s292 = scalar_select %p289, %s290, %s291
      %p295 = pneg %p289
      %p296 = scmp.eq.s32.totalorder %s35, 1
      %p297 = por %p295, %p296
      %p298 = scmp.ne.s32.totalorder %s290, %s293
      %p299 = scmp.eq.s32.totalorder %s35, 0
      %p300 = por %p298, %p299
      %p301 = scmp.ne.s32.totalorder %s290, %s293
      %p302 = scmp.eq.s32.totalorder %s40, 1
      %p303 = por %p301, %p302
      %p304 = scmp.ne.s32.totalorder %s293, %s294
      %p305 = scmp.eq.s32.totalorder %s40, 0
      %p306 = por %p304, %p305
      %p307 = scmp.ne.s32.totalorder %s293, %s294
      %p308 = scmp.eq.s32.totalorder %s41, 1
      %p309 = por %p307, %p308
      %p311 = scmp.ne.s32.totalorder %s294, %s310
      %p312 = scmp.eq.s32.totalorder %s41, 0
      %p313 = por %p311, %p312
      %s314 = ssub.s32 %s35, %s42
      %p315 = scmp.eq.s32.totalorder %s314, 0
      %s317 = sadd.s32 %s316, 1
      %s318 = scalar_select %p315, %s316, %s317
      %p321 = pneg %p315
      %p322 = scmp.eq.s32.totalorder %s35, 1
      %p323 = por %p321, %p322
      %p324 = scmp.ne.s32.totalorder %s316, %s319
      %p325 = scmp.eq.s32.totalorder %s35, 0
      %p326 = por %p324, %p325
      %p327 = scmp.ne.s32.totalorder %s316, %s319
      %p328 = scmp.eq.s32.totalorder %s40, 1
      %p329 = por %p327, %p328
      %p330 = scmp.ne.s32.totalorder %s319, %s320
      %p331 = scmp.eq.s32.totalorder %s40, 0
      %p332 = por %p330, %p331
      %p333 = scmp.ne.s32.totalorder %s319, %s320
      %p334 = scmp.eq.s32.totalorder %s41, 1
      %p335 = por %p333, %p334
      %p337 = scmp.ne.s32.totalorder %s320, %s336
      %p338 = scmp.eq.s32.totalorder %s41, 0
      %p339 = por %p337, %p338
      %s341 = sadd.s32 %s340, 1
      %p344 = scmp.eq.s32.totalorder %s35, 1
      %p345 = scmp.ne.s32.totalorder %s340, %s342
      %p346 = scmp.eq.s32.totalorder %s35, 0
      %p347 = por %p345, %p346
      %p348 = scmp.ne.s32.totalorder %s340, %s342
      %p349 = scmp.eq.s32.totalorder %s40, 1
      %p350 = por %p348, %p349
      %p351 = scmp.ne.s32.totalorder %s342, %s343
      %p352 = scmp.eq.s32.totalorder %s40, 0
      %p353 = por %p351, %p352
      %p354 = scmp.ne.s32.totalorder %s342, %s343
      %p355 = scmp.eq.s32.totalorder %s41, 1
      %p356 = por %p354, %p355
      %p358 = scmp.ne.s32.totalorder %s343, %s357
      %p359 = scmp.eq.s32.totalorder %s41, 0
      %p360 = por %p358, %p359
      %s362 = sadd.s32 %s361, 1
      %p365 = scmp.eq.s32.totalorder %s35, 1
      %p366 = scmp.ne.s32.totalorder %s361, %s363
      %p367 = scmp.eq.s32.totalorder %s35, 0
      %p368 = por %p366, %p367
      %p369 = scmp.ne.s32.totalorder %s361, %s363
      %p370 = scmp.eq.s32.totalorder %s40, 1
      %p371 = por %p369, %p370
      %p372 = scmp.ne.s32.totalorder %s363, %s364
      %p373 = scmp.eq.s32.totalorder %s40, 0
      %p374 = por %p372, %p373
      %p375 = scmp.ne.s32.totalorder %s363, %s364
      %p376 = scmp.eq.s32.totalorder %s41, 1
      %p377 = por %p375, %p376
      %p379 = scmp.ne.s32.totalorder %s364, %s378
      %p380 = scmp.eq.s32.totalorder %s41, 0
      %p381 = por %p379, %p380
      %s383 = sadd.s32 %s382, 1
      %p386 = scmp.eq.s32.totalorder %s35, 1
      %p387 = scmp.ne.s32.totalorder %s382, %s384
      %p388 = scmp.eq.s32.totalorder %s35, 0
      %p389 = por %p387, %p388
      %p390 = scmp.ne.s32.totalorder %s382, %s384
      %p391 = scmp.eq.s32.totalorder %s40, 1
      %p392 = por %p390, %p391
      %p393 = scmp.ne.s32.totalorder %s384, %s385
      %p394 = scmp.eq.s32.totalorder %s40, 0
      %p395 = por %p393, %p394
      %p396 = scmp.ne.s32.totalorder %s384, %s385
      %p397 = scmp.eq.s32.totalorder %s41, 1
      %p398 = por %p396, %p397
      %p400 = scmp.ne.s32.totalorder %s385, %s399
      %p401 = scmp.eq.s32.totalorder %s41, 0
      %p402 = por %p400, %p401
      %s404 = sadd.s32 %s403, 1
      %p407 = scmp.eq.s32.totalorder %s35, 1
      %p408 = scmp.ne.s32.totalorder %s403, %s405
      %p409 = scmp.eq.s32.totalorder %s35, 0
      %p410 = por %p408, %p409
      %p411 = scmp.ne.s32.totalorder %s403, %s405
      %p412 = scmp.eq.s32.totalorder %s40, 1
      %p413 = por %p411, %p412
      %p414 = scmp.ne.s32.totalorder %s405, %s406
      %p415 = scmp.eq.s32.totalorder %s40, 0
      %p416 = por %p414, %p415
      %p417 = scmp.ne.s32.totalorder %s405, %s406
      %p418 = scmp.eq.s32.totalorder %s41, 1
      %p419 = por %p417, %p418
      %p421 = scmp.ne.s32.totalorder %s406, %s420
      %p422 = scmp.eq.s32.totalorder %s41, 0
      %p423 = por %p421, %p422
      %s425 = sadd.s32 %s424, 1
      %p428 = scmp.eq.s32.totalorder %s35, 1
      %p429 = scmp.ne.s32.totalorder %s424, %s426
      %p430 = scmp.eq.s32.totalorder %s35, 0
      %p431 = por %p429, %p430
      %p432 = scmp.ne.s32.totalorder %s424, %s426
      %p433 = scmp.eq.s32.totalorder %s40, 1
      %p434 = por %p432, %p433
      %p435 = scmp.ne.s32.totalorder %s426, %s427
      %p436 = scmp.eq.s32.totalorder %s40, 0
      %p437 = por %p435, %p436
      %p438 = scmp.ne.s32.totalorder %s426, %s427
      %p439 = scmp.eq.s32.totalorder %s41, 1
      %p440 = por %p438, %p439
      %p442 = scmp.ne.s32.totalorder %s427, %s441
      %p443 = scmp.eq.s32.totalorder %s41, 0
      %p444 = por %p442, %p443
      %s446 = sadd.s32 %s445, 1
      %p449 = scmp.eq.s32.totalorder %s35, 1
      %p450 = scmp.ne.s32.totalorder %s445, %s447
      %p451 = scmp.eq.s32.totalorder %s35, 0
      %p452 = por %p450, %p451
      %p453 = scmp.ne.s32.totalorder %s445, %s447
      %p454 = scmp.eq.s32.totalorder %s40, 1
      %p455 = por %p453, %p454
      %p456 = scmp.ne.s32.totalorder %s447, %s448
      %p457 = scmp.eq.s32.totalorder %s40, 0
      %p458 = por %p456, %p457
      %p459 = scmp.ne.s32.totalorder %s447, %s448
      %p460 = scmp.eq.s32.totalorder %s41, 1
      %p461 = por %p459, %p460
      %p463 = scmp.ne.s32.totalorder %s448, %s462
      %p464 = scmp.eq.s32.totalorder %s41, 0
      %p465 = por %p463, %p464
      %p466 = scmp.le.s32.totalorder 1, %s35
      %p467 = scmp.lt.s32.totalorder %s35, 3
      %p468 = pnand %p466, %p467
      %p469 = pneg %p468
      // Predicated region
      $region9: #{tpu_custom_call.1} parent=5 // pred_check
        _
      $region10: #{tpu_custom_call.1} parent=5 // pred_check_branch
        %471 = sbr.rel (%p468) target = $region12
      $region11: #{tpu_custom_call.1} parent=5 // pred_region
        %s472 = ssub.s32 %s35, 1
        // Predicated region
        $region13: #{tpu_custom_call.1} parent=11 // pred_check
          %p473 = pneg %p56
        $region14: #{tpu_custom_call.1} parent=11 // pred_check_branch
          %475 = sbr.rel (%p473) target = $region16
        $region15: #{tpu_custom_call.1} parent=11 // pred_region
          %s477 = ssub.s32 256, 256
          %478 = vsyncadd [#allocation13], %s477
          %s479 = sshll.u32 [#allocation12], 4
          %s480 = int_to_ptr.vmem [resolvable:$true] %s479
          %485 = dma.hbm_to_vmem [thread:$0]  %s2, 256, %s480, [#allocation13], 128, 128, 8
        $region16: #{tpu_custom_call.1} parent=11 // pred_fallthru
          _
        // Predicated region
        $region17: #{tpu_custom_call.1} parent=11 // pred_check
          %p486 = pneg %p77
        $region18: #{tpu_custom_call.1} parent=11 // pred_check_branch
          %488 = sbr.rel (%p486) target = $region20
        $region19: #{tpu_custom_call.1} parent=11 // pred_region
          _
        $region20: #{tpu_custom_call.1} parent=11 // pred_fallthru
          _
        // Predicated region
        $region21: #{tpu_custom_call.1} parent=11 // pred_check
          %p489 = pneg %p98
        $region22: #{tpu_custom_call.1} parent=11 // pred_check_branch
          %491 = sbr.rel (%p489) target = $region24
        $region23: #{tpu_custom_call.1} parent=11 // pred_region
          %s493 = ssub.s32 16, 16
          %494 = vsyncadd [#allocation15], %s493
          %s496 = sshll.u32 [#allocation14], 4
          %s497 = int_to_ptr.vmem [resolvable:$true] %s496
          %499 = dma.hbm_to_vmem [thread:$0]  %s4, 16, %s497, [#allocation15]
        $region24: #{tpu_custom_call.1} parent=11 // pred_fallthru
          _
        // Predicated region
        $region25: #{tpu_custom_call.1} parent=11 // pred_check
          %p500 = pneg %p353
        $region26: #{tpu_custom_call.1} parent=11 // pred_check_branch
          %502 = sbr.rel (%p500) target = $region28
        $region27: #{tpu_custom_call.1} parent=11 // pred_region
          _
        $region28: #{tpu_custom_call.1} parent=11 // pred_fallthru
          _
        // Predicated region
        $region29: #{tpu_custom_call.1} parent=11 // pred_check
          %p503 = pneg %p374
        $region30: #{tpu_custom_call.1} parent=11 // pred_check_branch
          %505 = sbr.rel (%p503) target = $region32
        $region31: #{tpu_custom_call.1} parent=11 // pred_region
          _
        $region32: #{tpu_custom_call.1} parent=11 // pred_fallthru
          _
        // Predicated region
        $region33: #{tpu_custom_call.1} parent=11 // pred_check
          %p506 = pneg %p395
        $region34: #{tpu_custom_call.1} parent=11 // pred_check_branch
          %508 = sbr.rel (%p506) target = $region36
        $region35: #{tpu_custom_call.1} parent=11 // pred_region
          _
        $region36: #{tpu_custom_call.1} parent=11 // pred_fallthru
          _
        // Predicated region
        $region37: #{tpu_custom_call.1} parent=11 // pred_check
          %p509 = pneg %p416
        $region38: #{tpu_custom_call.1} parent=11 // pred_check_branch
          %511 = sbr.rel (%p509) target = $region40
        $region39: #{tpu_custom_call.1} parent=11 // pred_region
          _
        $region40: #{tpu_custom_call.1} parent=11 // pred_fallthru
          _
        // Predicated region
        $region41: #{tpu_custom_call.1} parent=11 // pred_check
          %p512 = pneg %p437
        $region42: #{tpu_custom_call.1} parent=11 // pred_check_branch
          %514 = sbr.rel (%p512) target = $region44
        $region43: #{tpu_custom_call.1} parent=11 // pred_region
          _
        $region44: #{tpu_custom_call.1} parent=11 // pred_fallthru
          _
      $region12: #{tpu_custom_call.1} parent=5 // pred_fallthru
        _
      %p515 = scmp.lt.s32.totalorder %s35, 2
      // Predicated region
      $region45: #{tpu_custom_call.1} parent=5 // pred_check
        %p516 = pneg %p515
      $region46: #{tpu_custom_call.1} parent=5 // pred_check_branch
        %518 = sbr.rel (%p516) target = $region48
      $region47: #{tpu_custom_call.1} parent=5 // pred_region
        // Predicated region
        $region49: #{tpu_custom_call.1} parent=47 // pred_check
          %p519 = pneg %p118
        $region50: #{tpu_custom_call.1} parent=47 // pred_check_branch
          %521 = sbr.rel (%p519) target = $region52
        $region51: #{tpu_custom_call.1} parent=47 // pred_region
          %s522 = sand.u32 %s35, 1
          %s523 = scalar_lea.sflag [#allocation13], %s522
          %s524 = sand.u32 %s108, 1
          %s525 = smul.addr %s524, 8
          %s526 = scalar_lea.vmem [#allocation16], %s525
          %s528 = ssub.s32 128, 128
          %529 = vsyncadd %s523, %s528
          %s530 = smul.addr %s35, 2
          %s531 = smul.addr %s530, 64
          %s532 = scalar_lea.hbm %s5, %s531
          %s533 = sshll.u32 %s526, 4
          %s534 = int_to_ptr.vmem [resolvable:$true] %s533
          %539 = dma.hbm_to_vmem [thread:$0]  %s532, 128, %s534, %s523, 64, 64, 4
        $region52: #{tpu_custom_call.1} parent=47 // pred_fallthru
          _
        // Predicated region
        $region53: #{tpu_custom_call.1} parent=47 // pred_check
          %p540 = pneg %p144
        $region54: #{tpu_custom_call.1} parent=47 // pred_check_branch
          %542 = sbr.rel (%p540) target = $region56
        $region55: #{tpu_custom_call.1} parent=47 // pred_region
          %s543 = sand.u32 %s35, 1
          %s544 = scalar_lea.sflag [#allocation13], %s543
          %s545 = sand.u32 %s134, 1
          %s546 = scalar_lea.vmem [#allocation17], %s545
          %s548 = ssub.s32 16, 16
          %549 = vsyncadd %s544, %s548
          %s550 = smul.addr %s35, 16
          %s551 = scalar_lea.hbm %s6, %s550
          %s553 = sshll.u32 %s546, 4
          %s554 = int_to_ptr.vmem [resolvable:$true] %s553
          %556 = dma.hbm_to_vmem [thread:$0]  %s551, 16, %s554, %s544
        $region56: #{tpu_custom_call.1} parent=47 // pred_fallthru
          _
        // Predicated region
        $region57: #{tpu_custom_call.1} parent=47 // pred_check
          %p557 = pneg %p170
        $region58: #{tpu_custom_call.1} parent=47 // pred_check_branch
          %559 = sbr.rel (%p557) target = $region60
        $region59: #{tpu_custom_call.1} parent=47 // pred_region
          %p560 = scmp.lt.s32.totalorder %s35, 1
          %s561 = scalar_select %p560, %s35, 1
          %s562 = smul.addr %s561, 4
          %s563 = smul.addr %s562, 4
          %s564 = scalar_lea.vmem %s7, %s563
        $region60: #{tpu_custom_call.1} parent=47 // pred_fallthru
          _
        // Predicated region
        $region61: #{tpu_custom_call.1} parent=47 // pred_check
          %p565 = pneg %p196
        $region62: #{tpu_custom_call.1} parent=47 // pred_check_branch
          %567 = sbr.rel (%p565) target = $region64
        $region63: #{tpu_custom_call.1} parent=47 // pred_region
          %s568 = sand.u32 %s35, 1
          %s569 = scalar_lea.sflag [#allocation13], %s568
          %s570 = sand.u32 %s186, 1
          %s571 = scalar_lea.vmem [#allocation18], %s570
          %s573 = ssub.s32 16, 16
          %574 = vsyncadd %s569, %s573
          %s575 = smul.addr %s35, 16
          %s576 = scalar_lea.hbm %s8, %s575
          %s578 = sshll.u32 %s571, 4
          %s579 = int_to_ptr.vmem [resolvable:$true] %s578
          %581 = dma.hbm_to_vmem [thread:$0]  %s576, 16, %s579, %s569
        $region64: #{tpu_custom_call.1} parent=47 // pred_fallthru
          _
        // Predicated region
        $region65: #{tpu_custom_call.1} parent=47 // pred_check
          %p582 = pneg %p222
        $region66: #{tpu_custom_call.1} parent=47 // pred_check_branch
          %584 = sbr.rel (%p582) target = $region68
        $region67: #{tpu_custom_call.1} parent=47 // pred_region
          %p585 = scmp.lt.s32.totalorder %s35, 1
          %s586 = scalar_select %p585, %s35, 1
          %s587 = smul.addr %s586, 4
          %s588 = smul.addr %s587, 4
          %s589 = scalar_lea.vmem %s9, %s588
        $region68: #{tpu_custom_call.1} parent=47 // pred_fallthru
          _
        // Predicated region
        $region69: #{tpu_custom_call.1} parent=47 // pred_check
          %p590 = pneg %p248
        $region70: #{tpu_custom_call.1} parent=47 // pred_check_branch
          %592 = sbr.rel (%p590) target = $region72
        $region71: #{tpu_custom_call.1} parent=47 // pred_region
          %p593 = scmp.lt.s32.totalorder %s35, 1
          %s594 = scalar_select %p593, %s35, 1
          %s595 = smul.addr %s594, 4
          %s596 = smul.addr %s595, 4
          %s597 = scalar_lea.vmem %s10, %s596
        $region72: #{tpu_custom_call.1} parent=47 // pred_fallthru
          _
        // Predicated region
        $region73: #{tpu_custom_call.1} parent=47 // pred_check
          %p598 = pneg %p274
        $region74: #{tpu_custom_call.1} parent=47 // pred_check_branch
          %600 = sbr.rel (%p598) target = $region76
        $region75: #{tpu_custom_call.1} parent=47 // pred_region
          %s601 = sand.u32 %s35, 1
          %s602 = scalar_lea.sflag [#allocation13], %s601
          %s603 = sand.u32 %s264, 1
          %s604 = scalar_lea.vmem [#allocation19], %s603
          %s606 = ssub.s32 16, 16
          %607 = vsyncadd %s602, %s606
          %s608 = smul.addr %s35, 16
          %s609 = scalar_lea.hbm %s11, %s608
          %s611 = sshll.u32 %s604, 4
          %s612 = int_to_ptr.vmem [resolvable:$true] %s611
          %614 = dma.hbm_to_vmem [thread:$0]  %s609, 16, %s612, %s602
        $region76: #{tpu_custom_call.1} parent=47 // pred_fallthru
          _
        // Predicated region
        $region77: #{tpu_custom_call.1} parent=47 // pred_check
          %p615 = pneg %p300
        $region78: #{tpu_custom_call.1} parent=47 // pred_check_branch
          %617 = sbr.rel (%p615) target = $region80
        $region79: #{tpu_custom_call.1} parent=47 // pred_region
          %s618 = sand.u32 %s35, 1
          %s619 = scalar_lea.sflag [#allocation13], %s618
          %s620 = sand.u32 %s290, 1
          %s621 = smul.addr %s620, 16
          %s622 = scalar_lea.vmem [#allocation20], %s621
          %s624 = ssub.s32 256, 256
          %625 = vsyncadd %s619, %s624
          %s626 = smul.addr %s35, 4
          %s627 = smul.addr %s626, 64
          %s628 = scalar_lea.hbm %s12, %s627
          %s629 = sshll.u32 %s622, 4
          %s630 = int_to_ptr.vmem [resolvable:$true] %s629
          %635 = dma.hbm_to_vmem [thread:$0]  %s628, 256, %s630, %s619, 64, 64, 4
        $region80: #{tpu_custom_call.1} parent=47 // pred_fallthru
          _
        // Predicated region
        $region81: #{tpu_custom_call.1} parent=47 // pred_check
          %p636 = pneg %p326
        $region82: #{tpu_custom_call.1} parent=47 // pred_check_branch
          %638 = sbr.rel (%p636) target = $region84
        $region83: #{tpu_custom_call.1} parent=47 // pred_region
          %p639 = scmp.lt.s32.totalorder %s35, 1
          %s640 = scalar_select %p639, %s35, 1
          %s641 = scalar_lea.vmem %s13, %s640
        $region84: #{tpu_custom_call.1} parent=47 // pred_fallthru
          _
      $region48: #{tpu_custom_call.1} parent=5 // pred_fallthru
        _
      %p642 = scmp.le.s32.totalorder 1, %s35
      %p643 = scmp.lt.s32.totalorder %s35, 3
      %p644 = pnand %p642, %p643
      %p645 = pneg %p644
      // Predicated region
      $region85: #{tpu_custom_call.1} parent=5 // pred_check
        _
      $region86: #{tpu_custom_call.1} parent=5 // pred_check_branch
        %647 = sbr.rel (%p644) target = $region88
      $region87: #{tpu_custom_call.1} parent=5 // pred_region
        %s648 = ssub.s32 %s35, 1
        // Predicated region
        $region89: #{tpu_custom_call.1} parent=87 // pred_check
          %p649 = pneg %p56
        $region90: #{tpu_custom_call.1} parent=87 // pred_check_branch
          %651 = sbr.rel (%p649) target = $region92
        $region91: #{tpu_custom_call.1} parent=87 // pred_region
          %652 = dma.done [#allocation13], 256
        $region92: #{tpu_custom_call.1} parent=87 // pred_fallthru
          _
        // Predicated region
        $region93: #{tpu_custom_call.1} parent=87 // pred_check
          %p653 = pneg %p98
        $region94: #{tpu_custom_call.1} parent=87 // pred_check_branch
          %655 = sbr.rel (%p653) target = $region96
        $region95: #{tpu_custom_call.1} parent=87 // pred_region
          %656 = dma.done [#allocation15], 16
        $region96: #{tpu_custom_call.1} parent=87 // pred_fallthru
          _
        %s657 = sand.u32 %s40, 1
        %s658 = scalar_lea.sflag [#allocation13], %s657
        %s659 = sand.u32 %s111, 1
        %s660 = smul.addr %s659, 8
        %s661 = scalar_lea.vmem [#allocation16], %s660
        // Predicated region
        $region97: #{tpu_custom_call.1} parent=87 // pred_check
          %p662 = pneg %p124
        $region98: #{tpu_custom_call.1} parent=87 // pred_check_branch
          %664 = sbr.rel (%p662) target = $region100
        $region99: #{tpu_custom_call.1} parent=87 // pred_region
          %665 = dma.done %s658, 128
        $region100: #{tpu_custom_call.1} parent=87 // pred_fallthru
          _
        %s666 = sand.u32 %s40, 1
        %s667 = scalar_lea.sflag [#allocation13], %s666
        %s668 = sand.u32 %s137, 1
        %s669 = scalar_lea.vmem [#allocation17], %s668
        // Predicated region
        $region101: #{tpu_custom_call.1} parent=87 // pred_check
          %p670 = pneg %p150
        $region102: #{tpu_custom_call.1} parent=87 // pred_check_branch
          %672 = sbr.rel (%p670) target = $region104
        $region103: #{tpu_custom_call.1} parent=87 // pred_region
          %673 = dma.done %s667, 16
        $region104: #{tpu_custom_call.1} parent=87 // pred_fallthru
          _
        %s674 = sand.u32 %s40, 1
        %s675 = scalar_lea.sflag [#allocation13], %s674
        %s676 = sand.u32 %s189, 1
        %s677 = scalar_lea.vmem [#allocation18], %s676
        // Predicated region
        $region105: #{tpu_custom_call.1} parent=87 // pred_check
          %p678 = pneg %p202
        $region106: #{tpu_custom_call.1} parent=87 // pred_check_branch
          %680 = sbr.rel (%p678) target = $region108
        $region107: #{tpu_custom_call.1} parent=87 // pred_region
          %681 = dma.done %s675, 16
        $region108: #{tpu_custom_call.1} parent=87 // pred_fallthru
          _
        %s682 = sand.u32 %s40, 1
        %s683 = scalar_lea.sflag [#allocation13], %s682
        %s684 = sand.u32 %s267, 1
        %s685 = scalar_lea.vmem [#allocation19], %s684
        // Predicated region
        $region109: #{tpu_custom_call.1} parent=87 // pred_check
          %p686 = pneg %p280
        $region110: #{tpu_custom_call.1} parent=87 // pred_check_branch
          %688 = sbr.rel (%p686) target = $region112
        $region111: #{tpu_custom_call.1} parent=87 // pred_region
          %689 = dma.done %s683, 16
        $region112: #{tpu_custom_call.1} parent=87 // pred_fallthru
          _
        %s690 = sand.u32 %s40, 1
        %s691 = scalar_lea.sflag [#allocation13], %s690
        %s692 = sand.u32 %s293, 1
        %s693 = smul.addr %s692, 16
        %s694 = scalar_lea.vmem [#allocation20], %s693
        // Predicated region
        $region113: #{tpu_custom_call.1} parent=87 // pred_check
          %p695 = pneg %p306
        $region114: #{tpu_custom_call.1} parent=87 // pred_check_branch
          %697 = sbr.rel (%p695) target = $region116
        $region115: #{tpu_custom_call.1} parent=87 // pred_region
          %698 = dma.done %s691, 256
        $region116: #{tpu_custom_call.1} parent=87 // pred_fallthru
          _
        %p699 = pneg %p56
        %p700 = pneg %p53
        %p701 = pneg %p77
        %p702 = pneg %p74
        %p703 = pneg %p98
        %p704 = pneg %p95
        %s705 = sand.u32 %s40, 1
        %s706 = scalar_lea.sflag [#allocation13], %s705
        %s707 = sand.u32 %s111, 1
        %s708 = smul.addr %s707, 8
        %s709 = scalar_lea.vmem [#allocation16], %s708
        %p710 = pneg %p124
        %p711 = pneg %p121
        %s712 = sand.u32 %s40, 1
        %s713 = scalar_lea.sflag [#allocation13], %s712
        %s714 = sand.u32 %s137, 1
        %s715 = scalar_lea.vmem [#allocation17], %s714
        %p716 = pneg %p150
        %p717 = pneg %p147
        %p718 = scmp.lt.s32.totalorder %s40, 1
        %s719 = scalar_select %p718, %s40, 1
        %s720 = smul.addr %s719, 4
        %s721 = smul.addr %s720, 4
        %s722 = scalar_lea.vmem %s7, %s721
        %p723 = pneg %p176
        %p724 = pneg %p173
        %s725 = sand.u32 %s40, 1
        %s726 = scalar_lea.sflag [#allocation13], %s725
        %s727 = sand.u32 %s189, 1
        %s728 = scalar_lea.vmem [#allocation18], %s727
        %p729 = pneg %p202
        %p730 = pneg %p199
        %p731 = scmp.lt.s32.totalorder %s40, 1
        %s732 = scalar_select %p731, %s40, 1
        %s733 = smul.addr %s732, 4
        %s734 = smul.addr %s733, 4
        %s735 = scalar_lea.vmem %s9, %s734
        %p736 = pneg %p228
        %p737 = pneg %p225
        %p738 = scmp.lt.s32.totalorder %s40, 1
        %s739 = scalar_select %p738, %s40, 1
        %s740 = smul.addr %s739, 4
        %s741 = smul.addr %s740, 4
        %s742 = scalar_lea.vmem %s10, %s741
        %p743 = pneg %p254
        %p744 = pneg %p251
        %s745 = sand.u32 %s40, 1
        %s746 = scalar_lea.sflag [#allocation13], %s745
        %s747 = sand.u32 %s267, 1
        %s748 = scalar_lea.vmem [#allocation19], %s747
        %p749 = pneg %p280
        %p750 = pneg %p277
        %s751 = sand.u32 %s40, 1
        %s752 = scalar_lea.sflag [#allocation13], %s751
        %s753 = sand.u32 %s293, 1
        %s754 = smul.addr %s753, 16
        %s755 = scalar_lea.vmem [#allocation20], %s754
        %p756 = pneg %p306
        %p757 = pneg %p303
        %p758 = scmp.lt.s32.totalorder %s40, 1
        %s759 = scalar_select %p758, %s40, 1
        %s760 = scalar_lea.vmem %s13, %s759
        %p761 = pneg %p332
        %p762 = pneg %p329
        %p763 = pneg %p353
        %p764 = pneg %p350
        %p765 = pneg %p374
        %p766 = pneg %p371
        %p767 = pneg %p395
        %p768 = pneg %p392
        %p769 = pneg %p416
        %p770 = pneg %p413
        %p771 = pneg %p437
        %p772 = pneg %p434
        %p773 = pneg %p458
        %p774 = pneg %p455
        %p775 = scmp.lt.s32.totalorder %s40, 1
        %s776 = scalar_select %p775, %s40, 1
        %s777 = smul.addr %s776, 4
        %s778 = smul.addr %s777, 4
        %s779 = scalar_lea.vmem %s7, %s778
        %p780 = scmp.lt.s32.totalorder %s40, 1
        %s781 = scalar_select %p780, %s40, 1
        %s782 = smul.addr %s781, 4
        %s783 = smul.addr %s782, 4
        %s784 = scalar_lea.vmem %s9, %s783
        %p785 = scmp.lt.s32.totalorder %s40, 1
        %s786 = scalar_select %p785, %s40, 1
        %s787 = smul.addr %s786, 4
        %s788 = smul.addr %s787, 4
        %s789 = scalar_lea.vmem %s10, %s788
        %p790 = scmp.lt.s32.totalorder %s40, 1
        %s791 = scalar_select %p790, %s40, 1
        %s792 = scalar_lea.vmem %s13, %s791
        %p794 = scmp.eq.s32.totalorder %s40, 0
        // Predicated region
        $region117: #{tpu_custom_call.1} parent=87 // pred_check
          %p795 = pneg %p794
        $region118: #{tpu_custom_call.1} parent=87 // pred_check_branch
          %797 = sbr.rel (%p795) target = $region120
        $region119: #{tpu_custom_call.1} parent=87 // pred_region
          %v798 = vld [vmem:[%s3] sm:$0xff]
          %v799 = vld [vmem:[%s3 + $0x8] sm:$0xff]
          %v800 = vld [vmem:[%s3 + $0x10] sm:$0xff]
          %v801 = vld [vmem:[%s3 + $0x18] sm:$0xff]
          %v802 = vld [vmem:[%s3 + $0x20] sm:$0xff]
          %v803 = vld [vmem:[%s3 + $0x28] sm:$0xff]
          %v804 = vld [vmem:[#allocation14] sm:$0x1]
          %806 = vset.pattern.permute.xlu0 0
          %807 = vperm.xlu0 %806, %v798
          %v808 = vpop.permute.xlu0 %807
          %811 = vset.pattern.permute.xlu0 0
          %812 = vperm.xlu0 %811, %v799
          %v813 = vpop.permute.xlu0 %812
          %816 = vset.pattern.permute.xlu0 0
          %817 = vperm.xlu0 %816, %v800
          %v818 = vpop.permute.xlu0 %817
          %821 = vset.pattern.permute.xlu0 0
          %822 = vperm.xlu0 %821, %v801
          %v823 = vpop.permute.xlu0 %822
          %826 = vset.pattern.permute.xlu0 0
          %827 = vperm.xlu0 %826, %v802
          %v828 = vpop.permute.xlu0 %827
          %831 = vset.pattern.permute.xlu0 0
          %832 = vperm.xlu0 %831, %v803
          %v833 = vpop.permute.xlu0 %832
          %v836 = vlaneseq
          %v837 = vshrl.u32 %v836, 7
          %v838 = vsub.s32 0, %v837
          %v839 = vrot.slane %v804, %v838
          %v841 = vsub.f32 %v808, %v839
          %v842 = vsub.f32 %v813, %v839
          %v843 = vsub.f32 %v818, %v839
          %v844 = vsub.f32 %v823, %v839
          %v845 = vsub.f32 %v828, %v839
          %v846 = vsub.f32 %v833, %v839
          %v847 = vmul.f32 %v841, -1.125
          %v848 = vmul.f32 %v842, -1.125
          %v849 = vmul.f32 %v843, -1.125
          %v850 = vmul.f32 %v844, -1.125
          %v851 = vmul.f32 %v845, -1.125
          %v852 = vmul.f32 %v846, -1.125
          %v853 = vmul.f32 %v847, %v841
          %v854 = vmul.f32 %v848, %v842
          %v855 = vmul.f32 %v849, %v843
          %v856 = vmul.f32 %v850, %v844
          %v857 = vmul.f32 %v851, %v845
          %v858 = vmul.f32 %v852, %v846
          %v859 = vmul.f32 %v853, 1.442695
          %v860 = vpow.pop %v859
          %v861 = vmul.f32 %v854, 1.442695
          %v862 = vpow.pop %v861
          %v863 = vmul.f32 %v855, 1.442695
          %v864 = vpow.pop %v863
          %v865 = vmul.f32 %v856, 1.442695
          %v866 = vpow.pop %v865
          %v867 = vmul.f32 %v857, 1.442695
          %v868 = vpow.pop %v867
          %v869 = vmul.f32 %v858, 1.442695
          %v870 = vpow.pop %v869
          %vm871 = vcmask 130048
          %872 = vst.msk [vmem:[#allocation3] sm:$0xff] %vm871, %v860
          %873 = vst.msk [vmem:[#allocation3 + $0x8] sm:$0xff] %vm871, %v862
          %874 = vst.msk [vmem:[#allocation3 + $0x10] sm:$0xff] %vm871, %v864
          %875 = vst.msk [vmem:[#allocation3 + $0x18] sm:$0xff] %vm871, %v866
          %876 = vst.msk [vmem:[#allocation3 + $0x20] sm:$0xff] %vm871, %v868
          %877 = vst.msk [vmem:[#allocation3 + $0x28] sm:$0xff] %vm871, %v870
          %v878 = vmul.f32 %v798, 0.31415927
          %v879 = vmul.f32 %v799, 0.31415927
          %v880 = vmul.f32 %v800, 0.31415927
          %v881 = vmul.f32 %v801, 0.31415927
          %v882 = vmul.f32 %v802, 0.31415927
          %v883 = vmul.f32 %v803, 0.31415927
          %v884 = vand.u32 2147483647, %v878
          %vm885 = vcmp.le.f32.partialorder %v884, 0.7853982
          %vm886 = vcmp.lt.s32.totalorder %v878, 0
          %v887 = vand.u32 %v878, 2139095040
          %v888 = vshrl.u32 %v887, 23
          %v889 = vsub.s32 %v888, 127
          %v890 = vand.u32 2147483647, %v878
          %v891 = vand.u32 %v890, 8388607
          %v892 = vor.u32 %v891, 8388608
          %v893 = vsub.s32 0, %v892
          %v894 = vadd.s32 %v889, 1
          %vm895 = vcmp.gt.s32.totalorder %v894, 0
          %v896 = vsel %vm895, %v894, 0
          %v897 = vshrl.u32 %v896, 5
          %v898 = vand.u32 %v896, 31
          %v899 = vsub.s32 32, %v898
          %v900 = vshrl.u32 683565275, %v899
          %v901 = vshll.u32 683565275, %v898
          %v902 = vshrl.u32 2475754826, %v899
          %v903 = vor.u32 %v901, %v902
          %v904 = vshll.u32 2475754826, %v898
          %v905 = vshrl.u32 2131351028, %v899
          %v906 = vor.u32 %v904, %v905
          %v907 = vshll.u32 2131351028, %v898
          %v908 = vshrl.u32 2102212464, %v899
          %v909 = vor.u32 %v907, %v908
          %v910 = vshll.u32 2102212464, %v898
          %v911 = vshrl.u32 920167782, %v899
          %v912 = vor.u32 %v910, %v911
          %v913 = vshll.u32 920167782, %v898
          %v914 = vshrl.u32 1326507024, %v899
          %v915 = vor.u32 %v913, %v914
          %vm916 = vcmp.lt.s32.totalorder %v897, 1
          %vm917 = vcmp.lt.s32.totalorder %v897, 2
          %vm918 = vcmp.lt.s32.totalorder %v897, 3
          %vm919 = vcmp.lt.s32.totalorder %v897, 4
          %v920 = vsel %vm916, %v900, %v903
          %v921 = vsel %vm919, %v909, 2102212464
          %v922 = vsel %vm918, %v906, %v921
          %v923 = vsel %vm917, %v920, %v922
          %v924 = vsel %vm916, %v903, %v906
          %v925 = vsel %vm919, %v912, 920167782
          %v926 = vsel %vm918, %v909, %v925
          %v927 = vsel %vm917, %v924, %v926
          %v928 = vsel %vm916, %v906, %v909
          %v929 = vsel %vm919, %v915, 1326507024
          %v930 = vsel %vm918, %v912, %v929
          %v931 = vsel %vm917, %v928, %v930
          %v932 = vshll.u32 %v892, 8
          %v933 = vmul.u32.u64.compose %v932, %v931
          %v934 = vextract.low.u32 %v933
          %v935 = vextract.high.u32 %v933
          %v936 = vmul.u32.u64.compose %v932, %v927
          %v937 = vextract.low.u32 %v936
          %v938 = vextract.high.u32 %v936
          %v939 = vmul.u32 %v932, %v923
          %v940 = vadd.s32 %v935, %v937
          %vm941 = vc.u32 %v935, %v937
          %v942 = vadd.s32 %v938, 1
          %v943 = vsel %vm941, %v942, %v938
          %v944 = vadd.s32 %v939, %v943
          %v945 = vadd.s32 %v944, 536870912
          %v946 = vshrl.u32 %v945, 30
          %v947 = vshll.u32 %v946, 30
          %v948 = vsub.s32 %v944, %v947
          %vm949 = vcmp.lt.s32.totalorder %v948, 0
          %v950 = vsub.s32 0, %v948
          %v951 = vsel %vm949, %v950, %v948
          %v952 = vclz %v951
          %v953 = vsub.s32 %v952, 2
          %vm954 = vcmp.gt.s32.totalorder 0, %v953
          %v955 = vsel %vm954, 0, %v953
          %v956 = vsub.s32 32, %v955
          %v957 = vshll.u32 %v948, %v955
          %v958 = vshrl.u32 %v940, %v956
          %v959 = vor.u32 %v957, %v958
          %v960 = vsub.s32 4294967266, %v955
          %v961 = vadd.s32 %v960, 127
          %v962 = vshll.u32 %v961, 23
          %v963 = vor.u32 4788187, %v962
          %v964 = vand.u32 2147483647, %v963
          %v966 = vcvt.s32.f32 %v959
          %v967 = vmul.f32 %v966, %v964
          %v968 = vxor.u32 %v967, 2147483648
          %v969 = vsel %vm886, %v968, %v967
          %v970 = vsub.s32 4, %v946
          %v971 = vsel %vm886, %v970, %v946
          %v972 = vsel %vm885, %v878, %v969
          %v973 = vsel %vm885, 0, %v971
          %v974 = vcosq.f32.pop %v972
          %v975 = vsinq.f32.pop %v972
          %vm976 = vweird.f32 %v878
          %v977 = vand.u32 %v973, 3
          %vm978 = vcmp.lt.s32.totalorder %v977, 2
          %vm979 = vcmp.eq.s32.totalorder %v977, 0
          %v980 = vxor.u32 %v975, 2147483648
          %v981 = vsel %vm979, %v974, %v980
          %vm982 = vcmp.eq.s32.totalorder %v977, 2
          %v983 = vxor.u32 %v974, 2147483648
          %v984 = vsel %vm982, %v983, %v975
          %v985 = vsel %vm978, %v981, %v984
          %v986 = vsel %vm976, nan, %v985
          %v987 = vand.u32 2147483647, %v879
          %vm988 = vcmp.le.f32.partialorder %v987, 0.7853982
          %vm989 = vcmp.lt.s32.totalorder %v879, 0
          %v990 = vand.u32 %v879, 2139095040
          %v991 = vshrl.u32 %v990, 23
          %v992 = vsub.s32 %v991, 127
          %v993 = vand.u32 2147483647, %v879
          %v994 = vand.u32 %v993, 8388607
          %v995 = vor.u32 %v994, 8388608
          %v996 = vsub.s32 0, %v995
          %v997 = vadd.s32 %v992, 1
          %vm998 = vcmp.gt.s32.totalorder %v997, 0
          %v999 = vsel %vm998, %v997, 0
          %v1000 = vshrl.u32 %v999, 5
          %v1001 = vand.u32 %v999, 31
          %v1002 = vsub.s32 32, %v1001
          %v1003 = vshrl.u32 683565275, %v1002
          %v1004 = vshll.u32 683565275, %v1001
          %v1005 = vshrl.u32 2475754826, %v1002
          %v1006 = vor.u32 %v1004, %v1005
          %v1007 = vshll.u32 2475754826, %v1001
          %v1008 = vshrl.u32 2131351028, %v1002
          %v1009 = vor.u32 %v1007, %v1008
          %v1010 = vshll.u32 2131351028, %v1001
          %v1011 = vshrl.u32 2102212464, %v1002
          %v1012 = vor.u32 %v1010, %v1011
          %v1013 = vshll.u32 2102212464, %v1001
          %v1014 = vshrl.u32 920167782, %v1002
          %v1015 = vor.u32 %v1013, %v1014
          %v1016 = vshll.u32 920167782, %v1001
          %v1017 = vshrl.u32 1326507024, %v1002
          %v1018 = vor.u32 %v1016, %v1017
          %vm1019 = vcmp.lt.s32.totalorder %v1000, 1
          %vm1020 = vcmp.lt.s32.totalorder %v1000, 2
          %vm1021 = vcmp.lt.s32.totalorder %v1000, 3
          %vm1022 = vcmp.lt.s32.totalorder %v1000, 4
          %v1023 = vsel %vm1019, %v1003, %v1006
          %v1024 = vsel %vm1022, %v1012, 2102212464
          %v1025 = vsel %vm1021, %v1009, %v1024
          %v1026 = vsel %vm1020, %v1023, %v1025
          %v1027 = vsel %vm1019, %v1006, %v1009
          %v1028 = vsel %vm1022, %v1015, 920167782
          %v1029 = vsel %vm1021, %v1012, %v1028
          %v1030 = vsel %vm1020, %v1027, %v1029
          %v1031 = vsel %vm1019, %v1009, %v1012
          %v1032 = vsel %vm1022, %v1018, 1326507024
          %v1033 = vsel %vm1021, %v1015, %v1032
          %v1034 = vsel %vm1020, %v1031, %v1033
          %v1035 = vshll.u32 %v995, 8
          %v1036 = vmul.u32.u64.compose %v1035, %v1034
          %v1037 = vextract.low.u32 %v1036
          %v1038 = vextract.high.u32 %v1036
          %v1039 = vmul.u32.u64.compose %v1035, %v1030
          %v1040 = vextract.low.u32 %v1039
          %v1041 = vextract.high.u32 %v1039
          %v1042 = vmul.u32 %v1035, %v1026
          %v1043 = vadd.s32 %v1038, %v1040
          %vm1044 = vc.u32 %v1038, %v1040
          %v1045 = vadd.s32 %v1041, 1
          %v1046 = vsel %vm1044, %v1045, %v1041
          %v1047 = vadd.s32 %v1042, %v1046
          %v1048 = vadd.s32 %v1047, 536870912
          %v1049 = vshrl.u32 %v1048, 30
          %v1050 = vshll.u32 %v1049, 30
          %v1051 = vsub.s32 %v1047, %v1050
          %vm1052 = vcmp.lt.s32.totalorder %v1051, 0
          %v1053 = vsub.s32 0, %v1051
          %v1054 = vsel %vm1052, %v1053, %v1051
          %v1055 = vclz %v1054
          %v1056 = vsub.s32 %v1055, 2
          %vm1057 = vcmp.gt.s32.totalorder 0, %v1056
          %v1058 = vsel %vm1057, 0, %v1056
          %v1059 = vsub.s32 32, %v1058
          %v1060 = vshll.u32 %v1051, %v1058
          %v1061 = vshrl.u32 %v1043, %v1059
          %v1062 = vor.u32 %v1060, %v1061
          %v1063 = vsub.s32 4294967266, %v1058
          %v1064 = vadd.s32 %v1063, 127
          %v1065 = vshll.u32 %v1064, 23
          %v1066 = vor.u32 4788187, %v1065
          %v1067 = vand.u32 2147483647, %v1066
          %v1069 = vcvt.s32.f32 %v1062
          %v1070 = vmul.f32 %v1069, %v1067
          %v1071 = vxor.u32 %v1070, 2147483648
          %v1072 = vsel %vm989, %v1071, %v1070
          %v1073 = vsub.s32 4, %v1049
          %v1074 = vsel %vm989, %v1073, %v1049
          %v1075 = vsel %vm988, %v879, %v1072
          %v1076 = vsel %vm988, 0, %v1074
          %v1077 = vcosq.f32.pop %v1075
          %v1078 = vsinq.f32.pop %v1075
          %vm1079 = vweird.f32 %v879
          %v1080 = vand.u32 %v1076, 3
          %vm1081 = vcmp.lt.s32.totalorder %v1080, 2
          %vm1082 = vcmp.eq.s32.totalorder %v1080, 0
          %v1083 = vxor.u32 %v1078, 2147483648
          %v1084 = vsel %vm1082, %v1077, %v1083
          %vm1085 = vcmp.eq.s32.totalorder %v1080, 2
          %v1086 = vxor.u32 %v1077, 2147483648
          %v1087 = vsel %vm1085, %v1086, %v1078
          %v1088 = vsel %vm1081, %v1084, %v1087
          %v1089 = vsel %vm1079, nan, %v1088
          %v1090 = vand.u32 2147483647, %v880
          %vm1091 = vcmp.le.f32.partialorder %v1090, 0.7853982
          %vm1092 = vcmp.lt.s32.totalorder %v880, 0
          %v1093 = vand.u32 %v880, 2139095040
          %v1094 = vshrl.u32 %v1093, 23
          %v1095 = vsub.s32 %v1094, 127
          %v1096 = vand.u32 2147483647, %v880
          %v1097 = vand.u32 %v1096, 8388607
          %v1098 = vor.u32 %v1097, 8388608
          %v1099 = vsub.s32 0, %v1098
          %v1100 = vadd.s32 %v1095, 1
          %vm1101 = vcmp.gt.s32.totalorder %v1100, 0
          %v1102 = vsel %vm1101, %v1100, 0
          %v1103 = vshrl.u32 %v1102, 5
          %v1104 = vand.u32 %v1102, 31
          %v1105 = vsub.s32 32, %v1104
          %v1106 = vshrl.u32 683565275, %v1105
          %v1107 = vshll.u32 683565275, %v1104
          %v1108 = vshrl.u32 2475754826, %v1105
          %v1109 = vor.u32 %v1107, %v1108
          %v1110 = vshll.u32 2475754826, %v1104
          %v1111 = vshrl.u32 2131351028, %v1105
          %v1112 = vor.u32 %v1110, %v1111
          %v1113 = vshll.u32 2131351028, %v1104
          %v1114 = vshrl.u32 2102212464, %v1105
          %v1115 = vor.u32 %v1113, %v1114
          %v1116 = vshll.u32 2102212464, %v1104
          %v1117 = vshrl.u32 920167782, %v1105
          %v1118 = vor.u32 %v1116, %v1117
          %v1119 = vshll.u32 920167782, %v1104
          %v1120 = vshrl.u32 1326507024, %v1105
          %v1121 = vor.u32 %v1119, %v1120
          %vm1122 = vcmp.lt.s32.totalorder %v1103, 1
          %vm1123 = vcmp.lt.s32.totalorder %v1103, 2
          %vm1124 = vcmp.lt.s32.totalorder %v1103, 3
          %vm1125 = vcmp.lt.s32.totalorder %v1103, 4
          %v1126 = vsel %vm1122, %v1106, %v1109
          %v1127 = vsel %vm1125, %v1115, 2102212464
          %v1128 = vsel %vm1124, %v1112, %v1127
          %v1129 = vsel %vm1123, %v1126, %v1128
          %v1130 = vsel %vm1122, %v1109, %v1112
          %v1131 = vsel %vm1125, %v1118, 920167782
          %v1132 = vsel %vm1124, %v1115, %v1131
          %v1133 = vsel %vm1123, %v1130, %v1132
          %v1134 = vsel %vm1122, %v1112, %v1115
          %v1135 = vsel %vm1125, %v1121, 1326507024
          %v1136 = vsel %vm1124, %v1118, %v1135
          %v1137 = vsel %vm1123, %v1134, %v1136
          %v1138 = vshll.u32 %v1098, 8
          %v1139 = vmul.u32.u64.compose %v1138, %v1137
          %v1140 = vextract.low.u32 %v1139
          %v1141 = vextract.high.u32 %v1139
          %v1142 = vmul.u32.u64.compose %v1138, %v1133
          %v1143 = vextract.low.u32 %v1142
          %v1144 = vextract.high.u32 %v1142
          %v1145 = vmul.u32 %v1138, %v1129
          %v1146 = vadd.s32 %v1141, %v1143
          %vm1147 = vc.u32 %v1141, %v1143
          %v1148 = vadd.s32 %v1144, 1
          %v1149 = vsel %vm1147, %v1148, %v1144
          %v1150 = vadd.s32 %v1145, %v1149
          %v1151 = vadd.s32 %v1150, 536870912
          %v1152 = vshrl.u32 %v1151, 30
          %v1153 = vshll.u32 %v1152, 30
          %v1154 = vsub.s32 %v1150, %v1153
          %vm1155 = vcmp.lt.s32.totalorder %v1154, 0
          %v1156 = vsub.s32 0, %v1154
          %v1157 = vsel %vm1155, %v1156, %v1154
          %v1158 = vclz %v1157
          %v1159 = vsub.s32 %v1158, 2
          %vm1160 = vcmp.gt.s32.totalorder 0, %v1159
          %v1161 = vsel %vm1160, 0, %v1159
          %v1162 = vsub.s32 32, %v1161
          %v1163 = vshll.u32 %v1154, %v1161
          %v1164 = vshrl.u32 %v1146, %v1162
          %v1165 = vor.u32 %v1163, %v1164
          %v1166 = vsub.s32 4294967266, %v1161
          %v1167 = vadd.s32 %v1166, 127
          %v1168 = vshll.u32 %v1167, 23
          %v1169 = vor.u32 4788187, %v1168
          %v1170 = vand.u32 2147483647, %v1169
          %v1172 = vcvt.s32.f32 %v1165
          %v1173 = vmul.f32 %v1172, %v1170
          %v1174 = vxor.u32 %v1173, 2147483648
          %v1175 = vsel %vm1092, %v1174, %v1173
          %v1176 = vsub.s32 4, %v1152
          %v1177 = vsel %vm1092, %v1176, %v1152
          %v1178 = vsel %vm1091, %v880, %v1175
          %v1179 = vsel %vm1091, 0, %v1177
          %v1180 = vcosq.f32.pop %v1178
          %v1181 = vsinq.f32.pop %v1178
          %vm1182 = vweird.f32 %v880
          %v1183 = vand.u32 %v1179, 3
          %vm1184 = vcmp.lt.s32.totalorder %v1183, 2
          %vm1185 = vcmp.eq.s32.totalorder %v1183, 0
          %v1186 = vxor.u32 %v1181, 2147483648
          %v1187 = vsel %vm1185, %v1180, %v1186
          %vm1188 = vcmp.eq.s32.totalorder %v1183, 2
          %v1189 = vxor.u32 %v1180, 2147483648
          %v1190 = vsel %vm1188, %v1189, %v1181
          %v1191 = vsel %vm1184, %v1187, %v1190
          %v1192 = vsel %vm1182, nan, %v1191
          %v1193 = vand.u32 2147483647, %v881
          %vm1194 = vcmp.le.f32.partialorder %v1193, 0.7853982
          %vm1195 = vcmp.lt.s32.totalorder %v881, 0
          %v1196 = vand.u32 %v881, 2139095040
          %v1197 = vshrl.u32 %v1196, 23
          %v1198 = vsub.s32 %v1197, 127
          %v1199 = vand.u32 2147483647, %v881
          %v1200 = vand.u32 %v1199, 8388607
          %v1201 = vor.u32 %v1200, 8388608
          %v1202 = vsub.s32 0, %v1201
          %v1203 = vadd.s32 %v1198, 1
          %vm1204 = vcmp.gt.s32.totalorder %v1203, 0
          %v1205 = vsel %vm1204, %v1203, 0
          %v1206 = vshrl.u32 %v1205, 5
          %v1207 = vand.u32 %v1205, 31
          %v1208 = vsub.s32 32, %v1207
          %v1209 = vshrl.u32 683565275, %v1208
          %v1210 = vshll.u32 683565275, %v1207
          %v1211 = vshrl.u32 2475754826, %v1208
          %v1212 = vor.u32 %v1210, %v1211
          %v1213 = vshll.u32 2475754826, %v1207
          %v1214 = vshrl.u32 2131351028, %v1208
          %v1215 = vor.u32 %v1213, %v1214
          %v1216 = vshll.u32 2131351028, %v1207
          %v1217 = vshrl.u32 2102212464, %v1208
          %v1218 = vor.u32 %v1216, %v1217
          %v1219 = vshll.u32 2102212464, %v1207
          %v1220 = vshrl.u32 920167782, %v1208
          %v1221 = vor.u32 %v1219, %v1220
          %v1222 = vshll.u32 920167782, %v1207
          %v1223 = vshrl.u32 1326507024, %v1208
          %v1224 = vor.u32 %v1222, %v1223
          %vm1225 = vcmp.lt.s32.totalorder %v1206, 1
          %vm1226 = vcmp.lt.s32.totalorder %v1206, 2
          %vm1227 = vcmp.lt.s32.totalorder %v1206, 3
          %vm1228 = vcmp.lt.s32.totalorder %v1206, 4
          %v1229 = vsel %vm1225, %v1209, %v1212
          %v1230 = vsel %vm1228, %v1218, 2102212464
          %v1231 = vsel %vm1227, %v1215, %v1230
          %v1232 = vsel %vm1226, %v1229, %v1231
          %v1233 = vsel %vm1225, %v1212, %v1215
          %v1234 = vsel %vm1228, %v1221, 920167782
          %v1235 = vsel %vm1227, %v1218, %v1234
          %v1236 = vsel %vm1226, %v1233, %v1235
          %v1237 = vsel %vm1225, %v1215, %v1218
          %v1238 = vsel %vm1228, %v1224, 1326507024
          %v1239 = vsel %vm1227, %v1221, %v1238
          %v1240 = vsel %vm1226, %v1237, %v1239
          %v1241 = vshll.u32 %v1201, 8
          %v1242 = vmul.u32.u64.compose %v1241, %v1240
          %v1243 = vextract.low.u32 %v1242
          %v1244 = vextract.high.u32 %v1242
          %v1245 = vmul.u32.u64.compose %v1241, %v1236
          %v1246 = vextract.low.u32 %v1245
          %v1247 = vextract.high.u32 %v1245
          %v1248 = vmul.u32 %v1241, %v1232
          %v1249 = vadd.s32 %v1244, %v1246
          %vm1250 = vc.u32 %v1244, %v1246
          %v1251 = vadd.s32 %v1247, 1
          %v1252 = vsel %vm1250, %v1251, %v1247
          %v1253 = vadd.s32 %v1248, %v1252
          %v1254 = vadd.s32 %v1253, 536870912
          %v1255 = vshrl.u32 %v1254, 30
          %v1256 = vshll.u32 %v1255, 30
          %v1257 = vsub.s32 %v1253, %v1256
          %vm1258 = vcmp.lt.s32.totalorder %v1257, 0
          %v1259 = vsub.s32 0, %v1257
          %v1260 = vsel %vm1258, %v1259, %v1257
          %v1261 = vclz %v1260
          %v1262 = vsub.s32 %v1261, 2
          %vm1263 = vcmp.gt.s32.totalorder 0, %v1262
          %v1264 = vsel %vm1263, 0, %v1262
          %v1265 = vsub.s32 32, %v1264
          %v1266 = vshll.u32 %v1257, %v1264
          %v1267 = vshrl.u32 %v1249, %v1265
          %v1268 = vor.u32 %v1266, %v1267
          %v1269 = vsub.s32 4294967266, %v1264
          %v1270 = vadd.s32 %v1269, 127
          %v1271 = vshll.u32 %v1270, 23
          %v1272 = vor.u32 4788187, %v1271
          %v1273 = vand.u32 2147483647, %v1272
          %v1275 = vcvt.s32.f32 %v1268
          %v1276 = vmul.f32 %v1275, %v1273
          %v1277 = vxor.u32 %v1276, 2147483648
          %v1278 = vsel %vm1195, %v1277, %v1276
          %v1279 = vsub.s32 4, %v1255
          %v1280 = vsel %vm1195, %v1279, %v1255
          %v1281 = vsel %vm1194, %v881, %v1278
          %v1282 = vsel %vm1194, 0, %v1280
          %v1283 = vcosq.f32.pop %v1281
          %v1284 = vsinq.f32.pop %v1281
          %vm1285 = vweird.f32 %v881
          %v1286 = vand.u32 %v1282, 3
          %vm1287 = vcmp.lt.s32.totalorder %v1286, 2
          %vm1288 = vcmp.eq.s32.totalorder %v1286, 0
          %v1289 = vxor.u32 %v1284, 2147483648
          %v1290 = vsel %vm1288, %v1283, %v1289
          %vm1291 = vcmp.eq.s32.totalorder %v1286, 2
          %v1292 = vxor.u32 %v1283, 2147483648
          %v1293 = vsel %vm1291, %v1292, %v1284
          %v1294 = vsel %vm1287, %v1290, %v1293
          %v1295 = vsel %vm1285, nan, %v1294
          %v1296 = vand.u32 2147483647, %v882
          %vm1297 = vcmp.le.f32.partialorder %v1296, 0.7853982
          %vm1298 = vcmp.lt.s32.totalorder %v882, 0
          %v1299 = vand.u32 %v882, 2139095040
          %v1300 = vshrl.u32 %v1299, 23
          %v1301 = vsub.s32 %v1300, 127
          %v1302 = vand.u32 2147483647, %v882
          %v1303 = vand.u32 %v1302, 8388607
          %v1304 = vor.u32 %v1303, 8388608
          %v1305 = vsub.s32 0, %v1304
          %v1306 = vadd.s32 %v1301, 1
          %vm1307 = vcmp.gt.s32.totalorder %v1306, 0
          %v1308 = vsel %vm1307, %v1306, 0
          %v1309 = vshrl.u32 %v1308, 5
          %v1310 = vand.u32 %v1308, 31
          %v1311 = vsub.s32 32, %v1310
          %v1312 = vshrl.u32 683565275, %v1311
          %v1313 = vshll.u32 683565275, %v1310
          %v1314 = vshrl.u32 2475754826, %v1311
          %v1315 = vor.u32 %v1313, %v1314
          %v1316 = vshll.u32 2475754826, %v1310
          %v1317 = vshrl.u32 2131351028, %v1311
          %v1318 = vor.u32 %v1316, %v1317
          %v1319 = vshll.u32 2131351028, %v1310
          %v1320 = vshrl.u32 2102212464, %v1311
          %v1321 = vor.u32 %v1319, %v1320
          %v1322 = vshll.u32 2102212464, %v1310
          %v1323 = vshrl.u32 920167782, %v1311
          %v1324 = vor.u32 %v1322, %v1323
          %v1325 = vshll.u32 920167782, %v1310
          %v1326 = vshrl.u32 1326507024, %v1311
          %v1327 = vor.u32 %v1325, %v1326
          %vm1328 = vcmp.lt.s32.totalorder %v1309, 1
          %vm1329 = vcmp.lt.s32.totalorder %v1309, 2
          %vm1330 = vcmp.lt.s32.totalorder %v1309, 3
          %vm1331 = vcmp.lt.s32.totalorder %v1309, 4
          %v1332 = vsel %vm1328, %v1312, %v1315
          %v1333 = vsel %vm1331, %v1321, 2102212464
          %v1334 = vsel %vm1330, %v1318, %v1333
          %v1335 = vsel %vm1329, %v1332, %v1334
          %v1336 = vsel %vm1328, %v1315, %v1318
          %v1337 = vsel %vm1331, %v1324, 920167782
          %v1338 = vsel %vm1330, %v1321, %v1337
          %v1339 = vsel %vm1329, %v1336, %v1338
          %v1340 = vsel %vm1328, %v1318, %v1321
          %v1341 = vsel %vm1331, %v1327, 1326507024
          %v1342 = vsel %vm1330, %v1324, %v1341
          %v1343 = vsel %vm1329, %v1340, %v1342
          %v1344 = vshll.u32 %v1304, 8
          %v1345 = vmul.u32.u64.compose %v1344, %v1343
          %v1346 = vextract.low.u32 %v1345
          %v1347 = vextract.high.u32 %v1345
          %v1348 = vmul.u32.u64.compose %v1344, %v1339
          %v1349 = vextract.low.u32 %v1348
          %v1350 = vextract.high.u32 %v1348
          %v1351 = vmul.u32 %v1344, %v1335
          %v1352 = vadd.s32 %v1347, %v1349
          %vm1353 = vc.u32 %v1347, %v1349
          %v1354 = vadd.s32 %v1350, 1
          %v1355 = vsel %vm1353, %v1354, %v1350
          %v1356 = vadd.s32 %v1351, %v1355
          %v1357 = vadd.s32 %v1356, 536870912
          %v1358 = vshrl.u32 %v1357, 30
          %v1359 = vshll.u32 %v1358, 30
          %v1360 = vsub.s32 %v1356, %v1359
          %vm1361 = vcmp.lt.s32.totalorder %v1360, 0
          %v1362 = vsub.s32 0, %v1360
          %v1363 = vsel %vm1361, %v1362, %v1360
          %v1364 = vclz %v1363
          %v1365 = vsub.s32 %v1364, 2
          %vm1366 = vcmp.gt.s32.totalorder 0, %v1365
          %v1367 = vsel %vm1366, 0, %v1365
          %v1368 = vsub.s32 32, %v1367
          %v1369 = vshll.u32 %v1360, %v1367
          %v1370 = vshrl.u32 %v1352, %v1368
          %v1371 = vor.u32 %v1369, %v1370
          %v1372 = vsub.s32 4294967266, %v1367
          %v1373 = vadd.s32 %v1372, 127
          %v1374 = vshll.u32 %v1373, 23
          %v1375 = vor.u32 4788187, %v1374
          %v1376 = vand.u32 2147483647, %v1375
          %v1378 = vcvt.s32.f32 %v1371
          %v1379 = vmul.f32 %v1378, %v1376
          %v1380 = vxor.u32 %v1379, 2147483648
          %v1381 = vsel %vm1298, %v1380, %v1379
          %v1382 = vsub.s32 4, %v1358
          %v1383 = vsel %vm1298, %v1382, %v1358
          %v1384 = vsel %vm1297, %v882, %v1381
          %v1385 = vsel %vm1297, 0, %v1383
          %v1386 = vcosq.f32.pop %v1384
          %v1387 = vsinq.f32.pop %v1384
          %vm1388 = vweird.f32 %v882
          %v1389 = vand.u32 %v1385, 3
          %vm1390 = vcmp.lt.s32.totalorder %v1389, 2
          %vm1391 = vcmp.eq.s32.totalorder %v1389, 0
          %v1392 = vxor.u32 %v1387, 2147483648
          %v1393 = vsel %vm1391, %v1386, %v1392
          %vm1394 = vcmp.eq.s32.totalorder %v1389, 2
          %v1395 = vxor.u32 %v1386, 2147483648
          %v1396 = vsel %vm1394, %v1395, %v1387
          %v1397 = vsel %vm1390, %v1393, %v1396
          %v1398 = vsel %vm1388, nan, %v1397
          %v1399 = vand.u32 2147483647, %v883
          %vm1400 = vcmp.le.f32.partialorder %v1399, 0.7853982
          %vm1401 = vcmp.lt.s32.totalorder %v883, 0
          %v1402 = vand.u32 %v883, 2139095040
          %v1403 = vshrl.u32 %v1402, 23
          %v1404 = vsub.s32 %v1403, 127
          %v1405 = vand.u32 2147483647, %v883
          %v1406 = vand.u32 %v1405, 8388607
          %v1407 = vor.u32 %v1406, 8388608
          %v1408 = vsub.s32 0, %v1407
          %v1409 = vadd.s32 %v1404, 1
          %vm1410 = vcmp.gt.s32.totalorder %v1409, 0
          %v1411 = vsel %vm1410, %v1409, 0
          %v1412 = vshrl.u32 %v1411, 5
          %v1413 = vand.u32 %v1411, 31
          %v1414 = vsub.s32 32, %v1413
          %v1415 = vshrl.u32 683565275, %v1414
          %v1416 = vshll.u32 683565275, %v1413
          %v1417 = vshrl.u32 2475754826, %v1414
          %v1418 = vor.u32 %v1416, %v1417
          %v1419 = vshll.u32 2475754826, %v1413
          %v1420 = vshrl.u32 2131351028, %v1414
          %v1421 = vor.u32 %v1419, %v1420
          %v1422 = vshll.u32 2131351028, %v1413
          %v1423 = vshrl.u32 2102212464, %v1414
          %v1424 = vor.u32 %v1422, %v1423
          %v1425 = vshll.u32 2102212464, %v1413
          %v1426 = vshrl.u32 920167782, %v1414
          %v1427 = vor.u32 %v1425, %v1426
          %v1428 = vshll.u32 920167782, %v1413
          %v1429 = vshrl.u32 1326507024, %v1414
          %v1430 = vor.u32 %v1428, %v1429
          %vm1431 = vcmp.lt.s32.totalorder %v1412, 1
          %vm1432 = vcmp.lt.s32.totalorder %v1412, 2
          %vm1433 = vcmp.lt.s32.totalorder %v1412, 3
          %vm1434 = vcmp.lt.s32.totalorder %v1412, 4
          %v1435 = vsel %vm1431, %v1415, %v1418
          %v1436 = vsel %vm1434, %v1424, 2102212464
          %v1437 = vsel %vm1433, %v1421, %v1436
          %v1438 = vsel %vm1432, %v1435, %v1437
          %v1439 = vsel %vm1431, %v1418, %v1421
          %v1440 = vsel %vm1434, %v1427, 920167782
          %v1441 = vsel %vm1433, %v1424, %v1440
          %v1442 = vsel %vm1432, %v1439, %v1441
          %v1443 = vsel %vm1431, %v1421, %v1424
          %v1444 = vsel %vm1434, %v1430, 1326507024
          %v1445 = vsel %vm1433, %v1427, %v1444
          %v1446 = vsel %vm1432, %v1443, %v1445
          %v1447 = vshll.u32 %v1407, 8
          %v1448 = vmul.u32.u64.compose %v1447, %v1446
          %v1449 = vextract.low.u32 %v1448
          %v1450 = vextract.high.u32 %v1448
          %v1451 = vmul.u32.u64.compose %v1447, %v1442
          %v1452 = vextract.low.u32 %v1451
          %v1453 = vextract.high.u32 %v1451
          %v1454 = vmul.u32 %v1447, %v1438
          %v1455 = vadd.s32 %v1450, %v1452
          %vm1456 = vc.u32 %v1450, %v1452
          %v1457 = vadd.s32 %v1453, 1
          %v1458 = vsel %vm1456, %v1457, %v1453
          %v1459 = vadd.s32 %v1454, %v1458
          %v1460 = vadd.s32 %v1459, 536870912
          %v1461 = vshrl.u32 %v1460, 30
          %v1462 = vshll.u32 %v1461, 30
          %v1463 = vsub.s32 %v1459, %v1462
          %vm1464 = vcmp.lt.s32.totalorder %v1463, 0
          %v1465 = vsub.s32 0, %v1463
          %v1466 = vsel %vm1464, %v1465, %v1463
          %v1467 = vclz %v1466
          %v1468 = vsub.s32 %v1467, 2
          %vm1469 = vcmp.gt.s32.totalorder 0, %v1468
          %v1470 = vsel %vm1469, 0, %v1468
          %v1471 = vsub.s32 32, %v1470
          %v1472 = vshll.u32 %v1463, %v1470
          %v1473 = vshrl.u32 %v1455, %v1471
          %v1474 = vor.u32 %v1472, %v1473
          %v1475 = vsub.s32 4294967266, %v1470
          %v1476 = vadd.s32 %v1475, 127
          %v1477 = vshll.u32 %v1476, 23
          %v1478 = vor.u32 4788187, %v1477
          %v1479 = vand.u32 2147483647, %v1478
          %v1481 = vcvt.s32.f32 %v1474
          %v1482 = vmul.f32 %v1481, %v1479
          %v1483 = vxor.u32 %v1482, 2147483648
          %v1484 = vsel %vm1401, %v1483, %v1482
          %v1485 = vsub.s32 4, %v1461
          %v1486 = vsel %vm1401, %v1485, %v1461
          %v1487 = vsel %vm1400, %v883, %v1484
          %v1488 = vsel %vm1400, 0, %v1486
          %v1489 = vcosq.f32.pop %v1487
          %v1490 = vsinq.f32.pop %v1487
          %vm1491 = vweird.f32 %v883
          %v1492 = vand.u32 %v1488, 3
          %vm1493 = vcmp.lt.s32.totalorder %v1492, 2
          %vm1494 = vcmp.eq.s32.totalorder %v1492, 0
          %v1495 = vxor.u32 %v1490, 2147483648
          %v1496 = vsel %vm1494, %v1489, %v1495
          %vm1497 = vcmp.eq.s32.totalorder %v1492, 2
          %v1498 = vxor.u32 %v1489, 2147483648
          %v1499 = vsel %vm1497, %v1498, %v1490
          %v1500 = vsel %vm1493, %v1496, %v1499
          %v1501 = vsel %vm1491, nan, %v1500
          %v1502 = vadd.f32 %v986, 1.0
          %v1503 = vadd.f32 %v1089, 1.0
          %v1504 = vadd.f32 %v1192, 1.0
          %v1505 = vadd.f32 %v1295, 1.0
          %v1506 = vadd.f32 %v1398, 1.0
          %v1507 = vadd.f32 %v1501, 1.0
          %v1508 = vmul.f32 %v1502, 0.5
          %v1509 = vmul.f32 %v1503, 0.5
          %v1510 = vmul.f32 %v1504, 0.5
          %v1511 = vmul.f32 %v1505, 0.5
          %v1512 = vmul.f32 %v1506, 0.5
          %v1513 = vmul.f32 %v1507, 0.5
          %vm1514 = vcmp.le.f32.partialorder %v798, 10.0
          %vm1515 = vcmp.le.f32.partialorder %v799, 10.0
          %vm1516 = vcmp.le.f32.partialorder %v800, 10.0
          %vm1517 = vcmp.le.f32.partialorder %v801, 10.0
          %vm1518 = vcmp.le.f32.partialorder %v802, 10.0
          %vm1519 = vcmp.le.f32.partialorder %v803, 10.0
          %v1520 = vsel %vm1514, 1, 0
          %v1521 = vsel %vm1515, 1, 0
          %v1522 = vsel %vm1516, 1, 0
          %v1523 = vsel %vm1517, 1, 0
          %v1524 = vsel %vm1518, 1, 0
          %v1525 = vsel %vm1519, 1, 0
          %v1526 = vcvt.s32.f32 %v1520
          %v1527 = vcvt.s32.f32 %v1521
          %v1528 = vcvt.s32.f32 %v1522
          %v1529 = vcvt.s32.f32 %v1523
          %v1530 = vcvt.s32.f32 %v1524
          %v1531 = vcvt.s32.f32 %v1525
          %v1532 = vmul.f32 %v1508, %v1526
          %v1533 = vmul.f32 %v1509, %v1527
          %v1534 = vmul.f32 %v1510, %v1528
          %v1535 = vmul.f32 %v1511, %v1529
          %v1536 = vmul.f32 %v1512, %v1530
          %v1537 = vmul.f32 %v1513, %v1531
          %vm1538 = vcmask 7168
          %1539 = vst.msk [vmem:[#allocation4] sm:$0xff] %vm1538, %v1532
          %1540 = vst.msk [vmem:[#allocation4 + $0x8] sm:$0xff] %vm1538, %v1533
          %1541 = vst.msk [vmem:[#allocation4 + $0x10] sm:$0xff] %vm1538, %v1534
          %1542 = vst.msk [vmem:[#allocation4 + $0x18] sm:$0xff] %vm1538, %v1535
          %1543 = vst.msk [vmem:[#allocation4 + $0x20] sm:$0xff] %vm1538, %v1536
          %1544 = vst.msk [vmem:[#allocation4 + $0x28] sm:$0xff] %vm1538, %v1537
          %v1545 = vld [vmem:[#allocation12] sm:$0xff]
          %v1546 = vld [vmem:[#allocation12 + $0x8] sm:$0xff]
          %vm1547 = vcmask 261120
          %1548 = vst.msk [vmem:[#allocation2] sm:$0xff] %vm1547, %v1545
          %1549 = vst.msk [vmem:[#allocation2 + $0x8] sm:$0xff] %vm1547, %v1546
        $region120: #{tpu_custom_call.1} parent=87 // pred_fallthru
          _
        %v1550 = vld [vmem:[#allocation2] sm:$0xff]
        %v1551 = vld [vmem:[#allocation2 + $0x8] sm:$0xff]
        %v1552 = vld [vmem:[#allocation3] sm:$0xff]
        %v1553 = vld [vmem:[#allocation3 + $0x8] sm:$0xff]
        %v1554 = vld [vmem:[#allocation3 + $0x10] sm:$0xff]
        %v1555 = vld [vmem:[#allocation3 + $0x18] sm:$0xff]
        %v1556 = vld [vmem:[#allocation3 + $0x20] sm:$0xff]
        %v1557 = vld [vmem:[#allocation3 + $0x28] sm:$0xff]
        %v1558 = vpack.c.bf16 %v1553, %v1552
        %v1559 = vpack.c.bf16 %v1555, %v1554
        %v1560 = vpack.c.bf16 %v1557, %v1556
        %v1561 = vld [vmem:[%s661] sm:$0xf]
        %v1562 = vld [vmem:[%s661 + $0x4] sm:$0xf]
        %v1563 = vld [vmem:[%s669] sm:$0x1]
        %v1565 = vlaneseq
        %v1566 = vshrl.u32 %v1565, 7
        %v1567 = vsub.s32 0, %v1566
        %v1568 = vrot.slane %v1563, %v1567
        %v1572 = vunpack.c.l.b16 %v1561
        %v1573 = vunpack.c.l.b16 %v1562
        %v1574 = vpack.c.b16 %v1573, %v1572
        %vm1576 = vcmask 130048
        %v1578 = vsel %vm1576, %v1558, 0
        %v1581 = vsel %vm1576, %v1559, 0
        %v1584 = vsel %vm1576, %v1560, 0
        %1586 = vmatprep.subr.bf16.mxu0 0
        %1587 = vmatpush1.bf16.msra.mxu0 0
        %1588 = vmatprep.subr.bf16.mxu0 0
        %1589 = vmatpush1.bf16.msra.mxu0 0
        %1590 = vmatprep.subr.bf16.mxu0 0
        %1591 = vmatpush1.bf16.msra.mxu0 0
        %1592 = vmatprep.subr.bf16.mxu0 0
        %1593 = vmatpush1.bf16.msra.mxu0 0
        %1594 = vmatprep.subr.bf16.mxu0 0
        %1595 = vmatpush1.bf16.msra.mxu0 0
        %1596 = vmatprep.subr.bf16.mxu0 0
        %1597 = vmatpush1.bf16.msra.mxu0 0
        %1598 = vmatprep.subr.bf16.mxu0 0
        %1599 = vmatpush1.bf16.msra.mxu0 0
        %1600 = vmatprep.subr.bf16.mxu0 0
        %1601 = vmatpush1.bf16.msra.mxu0 %v1574
        %1602 = vmatprep.subr.bf16.mxu0 0
        %1603 = vmatpush2.bf16.msra.mxu0 0
        %1604 = vmatprep.subr.bf16.mxu0 0
        %1605 = vmatpush2.bf16.msra.mxu0 0
        %1606 = vmatprep.subr.bf16.mxu0 0
        %1607 = vmatpush2.bf16.msra.mxu0 0
        %1608 = vmatprep.subr.bf16.mxu0 0
        %1609 = vmatpush2.bf16.msra.mxu0 0
        %1610 = vmatprep.subr.bf16.mxu0 0
        %1611 = vmatpush2.bf16.msra.mxu0 0
        %1612 = vmatprep.subr.bf16.mxu0 0
        %1613 = vmatpush2.bf16.msra.mxu0 0
        %1614 = vmatprep.subr.bf16.mxu0 0
        %1615 = vmatpush2.bf16.msra.mxu0 0
        %1616 = vmatprep.subr.bf16.mxu0 0
        %1617 = vmatpush2.bf16.msra.mxu0 0
        %1618 = vmatprep.mubr.bf16.mxu0 0
        %1619 = vmatmul.mubr.bf16.gmra.mxu0 %v1578
        %v1620 = vpop.f32.mrf.mxu0
        %v1621 = vadd.f32 %v1568, %v1620
        %v1622 = vpop.f32.mrf.mxu0
        %v1623 = vpop.f32.mrf.mxu0
        %v1624 = vadd.f32 %v1568, %v1623
        %v1625 = vpop.f32.mrf.mxu0
        %1626 = vmatprep.mubr.bf16.mxu0 0
        %1627 = vmatmul.mubr.bf16.gmra.mxu0 %v1581
        %v1628 = vpop.f32.mrf.mxu0
        %v1629 = vadd.f32 %v1568, %v1628
        %v1630 = vpop.f32.mrf.mxu0
        %v1631 = vpop.f32.mrf.mxu0
        %v1632 = vadd.f32 %v1568, %v1631
        %v1633 = vpop.f32.mrf.mxu0
        %1634 = vmatprep.mubr.bf16.mxu0 0
        %1635 = vmatmul.mubr.bf16.gmra.mxu0 %v1584
        %v1636 = vpop.f32.mrf.mxu0
        %v1637 = vadd.f32 %v1568, %v1636
        %v1638 = vpop.f32.mrf.mxu0
        %v1639 = vpop.f32.mrf.mxu0
        %v1640 = vadd.f32 %v1568, %v1639
        %v1641 = vpop.f32.mrf.mxu0
        %1642 = vdwg.mxu0
        %v1643 = vmax.f32 %v1621, 0.0
        %v1644 = vmax.f32 %v1624, 0.0
        %v1645 = vmax.f32 %v1629, 0.0
        %v1646 = vmax.f32 %v1632, 0.0
        %v1647 = vmax.f32 %v1637, 0.0
        %v1648 = vmax.f32 %v1640, 0.0
        %v1649 = vand.u32 2147483647, %v1621
        %v1650 = vand.u32 2147483647, %v1624
        %v1651 = vand.u32 2147483647, %v1629
        %v1652 = vand.u32 2147483647, %v1632
        %v1653 = vand.u32 2147483647, %v1637
        %v1654 = vand.u32 2147483647, %v1640
        %v1655 = vsub.f32 0.0, %v1649
        %v1656 = vsub.f32 0.0, %v1650
        %v1657 = vsub.f32 0.0, %v1651
        %v1658 = vsub.f32 0.0, %v1652
        %v1659 = vsub.f32 0.0, %v1653
        %v1660 = vsub.f32 0.0, %v1654
        %v1661 = vmul.f32 %v1655, 1.442695
        %v1662 = vpow.pop %v1661
        %v1663 = vmul.f32 %v1656, 1.442695
        %v1664 = vpow.pop %v1663
        %v1665 = vmul.f32 %v1657, 1.442695
        %v1666 = vpow.pop %v1665
        %v1667 = vmul.f32 %v1658, 1.442695
        %v1668 = vpow.pop %v1667
        %v1669 = vmul.f32 %v1659, 1.442695
        %v1670 = vpow.pop %v1669
        %v1671 = vmul.f32 %v1660, 1.442695
        %v1672 = vpow.pop %v1671
        %v1673 = vadd.f32 %v1662, 1.0
        %v1674 = vadd.f32 %v1664, 1.0
        %v1675 = vadd.f32 %v1666, 1.0
        %v1676 = vadd.f32 %v1668, 1.0
        %v1677 = vadd.f32 %v1670, 1.0
        %v1678 = vadd.f32 %v1672, 1.0
        %v1679 = vlog2.pop %v1673
        %v1680 = vmul.f32 %v1679, 0.6931472
        %v1681 = vlog2.pop %v1674
        %v1682 = vmul.f32 %v1681, 0.6931472
        %v1683 = vlog2.pop %v1675
        %v1684 = vmul.f32 %v1683, 0.6931472
        %v1685 = vlog2.pop %v1676
        %v1686 = vmul.f32 %v1685, 0.6931472
        %v1687 = vlog2.pop %v1677
        %v1688 = vmul.f32 %v1687, 0.6931472
        %v1689 = vlog2.pop %v1678
        %v1690 = vmul.f32 %v1689, 0.6931472
        %v1691 = vadd.f32 %v1643, %v1680
        %v1692 = vadd.f32 %v1644, %v1682
        %v1693 = vadd.f32 %v1645, %v1684
        %v1694 = vadd.f32 %v1646, %v1686
        %v1695 = vadd.f32 %v1647, %v1688
        %v1696 = vadd.f32 %v1648, %v1690
        %v1697 = vsub.f32 %v1691, 0.6931472
        %v1698 = vsub.f32 %v1692, 0.6931472
        %v1699 = vsub.f32 %v1693, 0.6931472
        %v1700 = vsub.f32 %v1694, 0.6931472
        %v1701 = vsub.f32 %v1695, 0.6931472
        %v1702 = vsub.f32 %v1696, 0.6931472
        %v1703 = vpack.c.bf16 %v1698, %v1697
        %v1704 = vpack.c.bf16 %v1700, %v1699
        %v1705 = vpack.c.bf16 %v1702, %v1701
        %v1706 = vld [vmem:[%s779] sm:$0xf]
        %v1707 = vld [vmem:[%s779 + $0x4] sm:$0xf]
        %v1708 = vld [vmem:[%s779 + $0x8] sm:$0xf]
        %v1709 = vld [vmem:[%s779 + $0xc] sm:$0xf]
        %v1710 = vld [vmem:[%s677] sm:$0x1]
        %v1712 = vlaneseq
        %v1713 = vshrl.u32 %v1712, 7
        %v1714 = vsub.s32 0, %v1713
        %v1715 = vrot.slane %v1710, %v1714
        %v1721 = vunpack.c.l.b16 %v1706
        %v1722 = vunpack.c.l.b16 %v1707
        %v1723 = vunpack.c.l.b16 %v1708
        %v1724 = vunpack.c.l.b16 %v1709
        %v1725 = vpack.c.b16 %v1722, %v1721
        %v1726 = vpack.c.b16 %v1724, %v1723
        %vm1729 = vcmask 261120
        %v1731 = vsel %vm1729, %v1703, 0
        %v1734 = vsel %vm1729, %v1704, 0
        %v1737 = vsel %vm1729, %v1705, 0
        %1739 = vmatprep.subr.bf16.mxu0 0
        %1740 = vmatpush1.bf16.msra.mxu0 0
        %1741 = vmatprep.subr.bf16.mxu0 0
        %1742 = vmatpush1.bf16.msra.mxu0 0
        %1743 = vmatprep.subr.bf16.mxu0 0
        %1744 = vmatpush1.bf16.msra.mxu0 0
        %1745 = vmatprep.subr.bf16.mxu0 0
        %1746 = vmatpush1.bf16.msra.mxu0 0
        %1747 = vmatprep.subr.bf16.mxu0 0
        %1748 = vmatpush1.bf16.msra.mxu0 0
        %1749 = vmatprep.subr.bf16.mxu0 0
        %1750 = vmatpush1.bf16.msra.mxu0 0
        %1751 = vmatprep.subr.bf16.mxu0 0
        %1752 = vmatpush1.bf16.msra.mxu0 %v1726
        %1753 = vmatprep.subr.bf16.mxu0 0
        %1754 = vmatpush1.bf16.msra.mxu0 %v1725
        %1755 = vmatprep.subr.bf16.mxu0 0
        %1756 = vmatpush2.bf16.msra.mxu0 0
        %1757 = vmatprep.subr.bf16.mxu0 0
        %1758 = vmatpush2.bf16.msra.mxu0 0
        %1759 = vmatprep.subr.bf16.mxu0 0
        %1760 = vmatpush2.bf16.msra.mxu0 0
        %1761 = vmatprep.subr.bf16.mxu0 0
        %1762 = vmatpush2.bf16.msra.mxu0 0
        %1763 = vmatprep.subr.bf16.mxu0 0
        %1764 = vmatpush2.bf16.msra.mxu0 0
        %1765 = vmatprep.subr.bf16.mxu0 0
        %1766 = vmatpush2.bf16.msra.mxu0 0
        %1767 = vmatprep.subr.bf16.mxu0 0
        %1768 = vmatpush2.bf16.msra.mxu0 0
        %1769 = vmatprep.subr.bf16.mxu0 0
        %1770 = vmatpush2.bf16.msra.mxu0 0
        %1771 = vmatprep.mubr.bf16.mxu0 0
        %1772 = vmatmul.mubr.bf16.gmra.mxu0 %v1731
        %v1773 = vpop.f32.mrf.mxu0
        %v1774 = vadd.f32 %v1715, %v1773
        %v1775 = vpop.f32.mrf.mxu0
        %v1776 = vpop.f32.mrf.mxu0
        %v1777 = vadd.f32 %v1715, %v1776
        %v1778 = vpop.f32.mrf.mxu0
        %1779 = vmatprep.mubr.bf16.mxu0 0
        %1780 = vmatmul.mubr.bf16.gmra.mxu0 %v1734
        %v1781 = vpop.f32.mrf.mxu0
        %v1782 = vadd.f32 %v1715, %v1781
        %v1783 = vpop.f32.mrf.mxu0
        %v1784 = vpop.f32.mrf.mxu0
        %v1785 = vadd.f32 %v1715, %v1784
        %v1786 = vpop.f32.mrf.mxu0
        %1787 = vmatprep.mubr.bf16.mxu0 0
        %1788 = vmatmul.mubr.bf16.gmra.mxu0 %v1737
        %v1789 = vpop.f32.mrf.mxu0
        %v1790 = vadd.f32 %v1715, %v1789
        %v1791 = vpop.f32.mrf.mxu0
        %v1792 = vpop.f32.mrf.mxu0
        %v1793 = vadd.f32 %v1715, %v1792
        %v1794 = vpop.f32.mrf.mxu0
        %1795 = vdwg.mxu0
        %v1796 = vld [vmem:[#allocation4] sm:$0xff]
        %v1797 = vld [vmem:[#allocation4 + $0x8] sm:$0xff]
        %v1798 = vld [vmem:[#allocation4 + $0x10] sm:$0xff]
        %v1799 = vld [vmem:[#allocation4 + $0x18] sm:$0xff]
        %v1800 = vld [vmem:[#allocation4 + $0x20] sm:$0xff]
        %v1801 = vld [vmem:[#allocation4 + $0x28] sm:$0xff]
        %1803 = vset.pattern.permute.xlu0 0
        %1804 = vperm.xlu0 %1803, %v1796
        %v1805 = vpop.permute.xlu0 %1804
        %1808 = vset.pattern.permute.xlu0 0
        %1809 = vperm.xlu0 %1808, %v1797
        %v1810 = vpop.permute.xlu0 %1809
        %1813 = vset.pattern.permute.xlu0 0
        %1814 = vperm.xlu0 %1813, %v1798
        %v1815 = vpop.permute.xlu0 %1814
        %1818 = vset.pattern.permute.xlu0 0
        %1819 = vperm.xlu0 %1818, %v1799
        %v1820 = vpop.permute.xlu0 %1819
        %1823 = vset.pattern.permute.xlu0 0
        %1824 = vperm.xlu0 %1823, %v1800
        %v1825 = vpop.permute.xlu0 %1824
        %1828 = vset.pattern.permute.xlu0 0
        %1829 = vperm.xlu0 %1828, %v1801
        %v1830 = vpop.permute.xlu0 %1829
        %v1832 = vmul.f32 %v1774, %v1805
        %v1833 = vmul.f32 %v1777, %v1810
        %v1834 = vmul.f32 %v1782, %v1815
        %v1835 = vmul.f32 %v1785, %v1820
        %v1836 = vmul.f32 %v1790, %v1825
        %v1837 = vmul.f32 %v1793, %v1830
        %1838 = vst.msk [vmem:[#allocation6] sm:$0xff] %vm1729, %v1832
        %1839 = vst.msk [vmem:[#allocation6 + $0x8] sm:$0xff] %vm1729, %v1833
        %1840 = vst.msk [vmem:[#allocation6 + $0x10] sm:$0xff] %vm1729, %v1834
        %1841 = vst.msk [vmem:[#allocation6 + $0x18] sm:$0xff] %vm1729, %v1835
        %1842 = vst.msk [vmem:[#allocation6 + $0x20] sm:$0xff] %vm1729, %v1836
        %1843 = vst.msk [vmem:[#allocation6 + $0x28] sm:$0xff] %vm1729, %v1837
        %v1844 = vpack.c.bf16 %v1551, %v1550
        %v1845 = vld [vmem:[%s784] sm:$0xf]
        %v1846 = vld [vmem:[%s784 + $0x4] sm:$0xf]
        %v1847 = vld [vmem:[%s784 + $0x8] sm:$0xf]
        %v1848 = vld [vmem:[%s784 + $0xc] sm:$0xf]
        %v1853 = vunpack.c.l.b16 %v1845
        %v1854 = vunpack.c.l.b16 %v1846
        %v1855 = vunpack.c.l.b16 %v1847
        %v1856 = vunpack.c.l.b16 %v1848
        %v1857 = vpack.c.b16 %v1854, %v1853
        %v1858 = vpack.c.b16 %v1856, %v1855
        %v1862 = vsel %vm1729, %v1844, 0
        %1864 = vmatprep.subr.bf16.mxu0 0
        %1865 = vmatpush1.bf16.msra.mxu0 0
        %1866 = vmatprep.subr.bf16.mxu0 0
        %1867 = vmatpush1.bf16.msra.mxu0 0
        %1868 = vmatprep.subr.bf16.mxu0 0
        %1869 = vmatpush1.bf16.msra.mxu0 0
        %1870 = vmatprep.subr.bf16.mxu0 0
        %1871 = vmatpush1.bf16.msra.mxu0 0
        %1872 = vmatprep.subr.bf16.mxu0 0
        %1873 = vmatpush1.bf16.msra.mxu0 0
        %1874 = vmatprep.subr.bf16.mxu0 0
        %1875 = vmatpush1.bf16.msra.mxu0 0
        %1876 = vmatprep.subr.bf16.mxu0 0
        %1877 = vmatpush1.bf16.msra.mxu0 %v1858
        %1878 = vmatprep.subr.bf16.mxu0 0
        %1879 = vmatpush1.bf16.msra.mxu0 %v1857
        %1880 = vmatprep.subr.bf16.mxu0 0
        %1881 = vmatpush2.bf16.msra.mxu0 0
        %1882 = vmatprep.subr.bf16.mxu0 0
        %1883 = vmatpush2.bf16.msra.mxu0 0
        %1884 = vmatprep.subr.bf16.mxu0 0
        %1885 = vmatpush2.bf16.msra.mxu0 0
        %1886 = vmatprep.subr.bf16.mxu0 0
        %1887 = vmatpush2.bf16.msra.mxu0 0
        %1888 = vmatprep.subr.bf16.mxu0 0
        %1889 = vmatpush2.bf16.msra.mxu0 0
        %1890 = vmatprep.subr.bf16.mxu0 0
        %1891 = vmatpush2.bf16.msra.mxu0 0
        %1892 = vmatprep.subr.bf16.mxu0 0
        %1893 = vmatpush2.bf16.msra.mxu0 0
        %1894 = vmatprep.subr.bf16.mxu0 0
        %1895 = vmatpush2.bf16.msra.mxu0 0
        %1896 = vmatprep.mubr.bf16.mxu0 0
        %1897 = vmatmul.mubr.bf16.gmra.mxu0 %v1862
        %v1898 = vpop.f32.mrf.mxu0
        %v1899 = vadd.f32 0.0, %v1898
        %v1900 = vpop.f32.mrf.mxu0
        %v1901 = vpop.f32.mrf.mxu0
        %v1902 = vadd.f32 0.0, %v1901
        %v1903 = vpop.f32.mrf.mxu0
        %1904 = vdwg.mxu0
        %1905 = vst.msk [vmem:[#allocation5] sm:$0xff] %vm1729, %v1899
        %1906 = vst.msk [vmem:[#allocation5 + $0x8] sm:$0xff] %vm1729, %v1902
        %1907 = vst.msk [vmem:[#allocation7] sm:$0xff] %vm1729, 0.0
        %1908 = vst.msk [vmem:[#allocation7 + $0x8] sm:$0xff] %vm1729, 0.0
        loop: start=0, step=1, limit=48
        $region121: #{tpu_custom_call.1} parent=87 // loop_pre_header
          _
        $region122: #{tpu_custom_call.1} parent=87 // loop_header
          %s1910 = sphi 0, %s1914
          %p1911 = scmp.ge.s32.totalorder %s1910, 48
        $region123: #{tpu_custom_call.1} parent=87 // loop_header_branch
          %1913 = sbr.rel (%p1911) target = $region127
        $region124: #{tpu_custom_call.1} parent=87 // loop_body
          %s1915 = sld [smem:[#allocation9 + %s1910]]
          %s1916 = sld [smem:[#allocation10 + %s1910]]
          %s1917 = scalar_lea.vmem [#allocation5], %s1915
          %v1918 = vld [vmem:[%s1917] sm:$0x1]
          %s1919 = scalar_lea.vmem [#allocation6], %s1910
          %v1920 = vld [vmem:[%s1919] sm:$0x1]
          %v1921 = vmul.f32 %v1918, %v1920
          %s1922 = scalar_lea.vmem [#allocation7], %s1916
          %v1923 = vld [vmem:[%s1922] sm:$0x1]
          %v1924 = vadd.f32 %v1923, %v1921
          %vm1925 = vcmask 253952
          %1926 = vst.msk [vmem:[%s1922] sm:$0x1] %vm1925, %v1924
        $region125: #{tpu_custom_call.1} parent=87 // loop_footer
          %s1914 = sadd.s32 1, %s1910
        $region126: #{tpu_custom_call.1} parent=87 // loop_footer_branch
          %1909 = sbr.rel target = $region122
        $region127: #{tpu_custom_call.1} parent=87 // loop_exit
          _
        %v1927 = vld [vmem:[#allocation7] sm:$0xff]
        %v1928 = vld [vmem:[#allocation7 + $0x8] sm:$0xff]
        %v1929 = vpack.c.bf16 %v1928, %v1927
        %v1930 = vld [vmem:[%s789] sm:$0xf]
        %v1931 = vld [vmem:[%s789 + $0x4] sm:$0xf]
        %v1932 = vld [vmem:[%s789 + $0x8] sm:$0xf]
        %v1933 = vld [vmem:[%s789 + $0xc] sm:$0xf]
        %v1934 = vld [vmem:[%s685] sm:$0x1]
        %v1936 = vlaneseq
        %v1937 = vshrl.u32 %v1936, 7
        %v1938 = vsub.s32 0, %v1937
        %v1939 = vrot.slane %v1934, %v1938
        %v1945 = vunpack.c.l.b16 %v1930
        %v1946 = vunpack.c.l.b16 %v1931
        %v1947 = vunpack.c.l.b16 %v1932
        %v1948 = vunpack.c.l.b16 %v1933
        %v1949 = vpack.c.b16 %v1946, %v1945
        %v1950 = vpack.c.b16 %v1948, %v1947
        %v1954 = vsel %vm1729, %v1929, 0
        %1956 = vmatprep.subr.bf16.mxu0 0
        %1957 = vmatpush1.bf16.msra.mxu0 0
        %1958 = vmatprep.subr.bf16.mxu0 0
        %1959 = vmatpush1.bf16.msra.mxu0 0
        %1960 = vmatprep.subr.bf16.mxu0 0
        %1961 = vmatpush1.bf16.msra.mxu0 0
        %1962 = vmatprep.subr.bf16.mxu0 0
        %1963 = vmatpush1.bf16.msra.mxu0 0
        %1964 = vmatprep.subr.bf16.mxu0 0
        %1965 = vmatpush1.bf16.msra.mxu0 0
        %1966 = vmatprep.subr.bf16.mxu0 0
        %1967 = vmatpush1.bf16.msra.mxu0 0
        %1968 = vmatprep.subr.bf16.mxu0 0
        %1969 = vmatpush1.bf16.msra.mxu0 %v1950
        %1970 = vmatprep.subr.bf16.mxu0 0
        %1971 = vmatpush1.bf16.msra.mxu0 %v1949
        %1972 = vmatprep.subr.bf16.mxu0 0
        %1973 = vmatpush2.bf16.msra.mxu0 0
        %1974 = vmatprep.subr.bf16.mxu0 0
        %1975 = vmatpush2.bf16.msra.mxu0 0
        %1976 = vmatprep.subr.bf16.mxu0 0
        %1977 = vmatpush2.bf16.msra.mxu0 0
        %1978 = vmatprep.subr.bf16.mxu0 0
        %1979 = vmatpush2.bf16.msra.mxu0 0
        %1980 = vmatprep.subr.bf16.mxu0 0
        %1981 = vmatpush2.bf16.msra.mxu0 0
        %1982 = vmatprep.subr.bf16.mxu0 0
        %1983 = vmatpush2.bf16.msra.mxu0 0
        %1984 = vmatprep.subr.bf16.mxu0 0
        %1985 = vmatpush2.bf16.msra.mxu0 0
        %1986 = vmatprep.subr.bf16.mxu0 0
        %1987 = vmatpush2.bf16.msra.mxu0 0
        %1988 = vmatprep.mubr.bf16.mxu0 0
        %1989 = vmatmul.mubr.bf16.gmra.mxu0 %v1954
        %v1990 = vpop.f32.mrf.mxu0
        %v1991 = vadd.f32 %v1939, %v1990
        %v1992 = vpop.f32.mrf.mxu0
        %v1993 = vpop.f32.mrf.mxu0
        %v1994 = vadd.f32 %v1939, %v1993
        %v1995 = vpop.f32.mrf.mxu0
        %1996 = vdwg.mxu0
        %v1997 = vmax.f32 %v1991, 0.0
        %v1998 = vmax.f32 %v1994, 0.0
        %v1999 = vand.u32 2147483647, %v1991
        %v2000 = vand.u32 2147483647, %v1994
        %v2001 = vsub.f32 0.0, %v1999
        %v2002 = vsub.f32 0.0, %v2000
        %v2003 = vmul.f32 %v2001, 1.442695
        %v2004 = vpow.pop %v2003
        %v2005 = vmul.f32 %v2002, 1.442695
        %v2006 = vpow.pop %v2005
        %v2007 = vadd.f32 %v2004, 1.0
        %v2008 = vadd.f32 %v2006, 1.0
        %v2009 = vlog2.pop %v2007
        %v2010 = vmul.f32 %v2009, 0.6931472
        %v2011 = vlog2.pop %v2008
        %v2012 = vmul.f32 %v2011, 0.6931472
        %v2013 = vadd.f32 %v1997, %v2010
        %v2014 = vadd.f32 %v1998, %v2012
        %v2015 = vsub.f32 %v2013, 0.6931472
        %v2016 = vsub.f32 %v2014, 0.6931472
        %v2017 = vpack.c.bf16 %v2016, %v2015
        %v2018 = vld [vmem:[%s694] sm:$0xf]
        %v2019 = vld [vmem:[%s694 + $0x4] sm:$0xf]
        %v2020 = vld [vmem:[%s694 + $0x8] sm:$0xf]
        %v2021 = vld [vmem:[%s694 + $0xc] sm:$0xf]
        %v2022 = vld [vmem:[%s792] sm:$0x1]
        %v2024 = vlaneseq
        %v2025 = vshrl.u32 %v2024, 7
        %v2026 = vsub.s32 0, %v2025
        %v2027 = vrot.slane %v2022, %v2026
        %v2033 = vunpack.c.l.b16 %v2018
        %v2034 = vunpack.c.l.b16 %v2019
        %v2035 = vunpack.c.l.b16 %v2020
        %v2036 = vunpack.c.l.b16 %v2021
        %v2037 = vpack.c.b16 %v2034, %v2033
        %v2038 = vpack.c.b16 %v2036, %v2035
        %v2042 = vsel %vm1729, %v2017, 0
        %2044 = vmatprep.subr.bf16.mxu0 0
        %2045 = vmatpush1.bf16.msra.mxu0 0
        %2046 = vmatprep.subr.bf16.mxu0 0
        %2047 = vmatpush1.bf16.msra.mxu0 0
        %2048 = vmatprep.subr.bf16.mxu0 0
        %2049 = vmatpush1.bf16.msra.mxu0 0
        %2050 = vmatprep.subr.bf16.mxu0 0
        %2051 = vmatpush1.bf16.msra.mxu0 0
        %2052 = vmatprep.subr.bf16.mxu0 0
        %2053 = vmatpush1.bf16.msra.mxu0 0
        %2054 = vmatprep.subr.bf16.mxu0 0
        %2055 = vmatpush1.bf16.msra.mxu0 0
        %2056 = vmatprep.subr.bf16.mxu0 0
        %2057 = vmatpush1.bf16.msra.mxu0 %v2038
        %2058 = vmatprep.subr.bf16.mxu0 0
        %2059 = vmatpush1.bf16.msra.mxu0 %v2037
        %2060 = vmatprep.subr.bf16.mxu0 0
        %2061 = vmatpush2.bf16.msra.mxu0 0
        %2062 = vmatprep.subr.bf16.mxu0 0
        %2063 = vmatpush2.bf16.msra.mxu0 0
        %2064 = vmatprep.subr.bf16.mxu0 0
        %2065 = vmatpush2.bf16.msra.mxu0 0
        %2066 = vmatprep.subr.bf16.mxu0 0
        %2067 = vmatpush2.bf16.msra.mxu0 0
        %2068 = vmatprep.subr.bf16.mxu0 0
        %2069 = vmatpush2.bf16.msra.mxu0 0
        %2070 = vmatprep.subr.bf16.mxu0 0
        %2071 = vmatpush2.bf16.msra.mxu0 0
        %2072 = vmatprep.subr.bf16.mxu0 0
        %2073 = vmatpush2.bf16.msra.mxu0 0
        %2074 = vmatprep.subr.bf16.mxu0 0
        %2075 = vmatpush2.bf16.msra.mxu0 0
        %2076 = vmatprep.mubr.bf16.mxu0 0
        %2077 = vmatmul.mubr.bf16.gmra.mxu0 %v2042
        %v2078 = vpop.f32.mrf.mxu0
        %v2079 = vadd.f32 %v2027, %v2078
        %v2080 = vpop.f32.mrf.mxu0
        %v2081 = vpop.f32.mrf.mxu0
        %v2082 = vadd.f32 %v2027, %v2081
        %v2083 = vpop.f32.mrf.mxu0
        %2084 = vdwg.mxu0
        %v2085 = vadd.f32 %v1550, %v2079
        %v2086 = vadd.f32 %v1551, %v2082
        %2087 = vst.msk [vmem:[#allocation2] sm:$0xff] %vm1729, %v2085
        %2088 = vst.msk [vmem:[#allocation2 + $0x8] sm:$0xff] %vm1729, %v2086
        %p2089 = scmp.eq.s32.totalorder %s40, 1
        // Predicated region
        $region128: #{tpu_custom_call.1} parent=87 // pred_check
          %p2090 = pneg %p2089
        $region129: #{tpu_custom_call.1} parent=87 // pred_check_branch
          %2092 = sbr.rel (%p2090) target = $region131
        $region130: #{tpu_custom_call.1} parent=87 // pred_region
          %v2093 = vld [vmem:[#allocation2] sm:$0xff]
          %v2094 = vld [vmem:[#allocation2 + $0x8] sm:$0xff]
          %v2095 = vpack.c.bf16 %v2094, %v2093
          %v2096 = vld [vmem:[%s14] sm:$0xf]
          %v2097 = vld [vmem:[%s14 + $0x4] sm:$0xf]
          %v2098 = vld [vmem:[%s14 + $0x8] sm:$0xf]
          %v2099 = vld [vmem:[%s14 + $0xc] sm:$0xf]
          %v2100 = vld [vmem:[%s15] sm:$0x1]
          %v2102 = vlaneseq
          %v2103 = vshrl.u32 %v2102, 7
          %v2104 = vsub.s32 0, %v2103
          %v2105 = vrot.slane %v2100, %v2104
          %v2111 = vunpack.c.l.b16 %v2096
          %v2112 = vunpack.c.l.b16 %v2097
          %v2113 = vunpack.c.l.b16 %v2098
          %v2114 = vunpack.c.l.b16 %v2099
          %v2115 = vpack.c.b16 %v2112, %v2111
          %v2116 = vpack.c.b16 %v2114, %v2113
          %v2120 = vsel %vm1729, %v2095, 0
          %2122 = vmatprep.subr.bf16.mxu0 0
          %2123 = vmatpush1.bf16.msra.mxu0 0
          %2124 = vmatprep.subr.bf16.mxu0 0
          %2125 = vmatpush1.bf16.msra.mxu0 0
          %2126 = vmatprep.subr.bf16.mxu0 0
          %2127 = vmatpush1.bf16.msra.mxu0 0
          %2128 = vmatprep.subr.bf16.mxu0 0
          %2129 = vmatpush1.bf16.msra.mxu0 0
          %2130 = vmatprep.subr.bf16.mxu0 0
          %2131 = vmatpush1.bf16.msra.mxu0 0
          %2132 = vmatprep.subr.bf16.mxu0 0
          %2133 = vmatpush1.bf16.msra.mxu0 0
          %2134 = vmatprep.subr.bf16.mxu0 0
          %2135 = vmatpush1.bf16.msra.mxu0 %v2116
          %2136 = vmatprep.subr.bf16.mxu0 0
          %2137 = vmatpush1.bf16.msra.mxu0 %v2115
          %2138 = vmatprep.subr.bf16.mxu0 0
          %2139 = vmatpush2.bf16.msra.mxu0 0
          %2140 = vmatprep.subr.bf16.mxu0 0
          %2141 = vmatpush2.bf16.msra.mxu0 0
          %2142 = vmatprep.subr.bf16.mxu0 0
          %2143 = vmatpush2.bf16.msra.mxu0 0
          %2144 = vmatprep.subr.bf16.mxu0 0
          %2145 = vmatpush2.bf16.msra.mxu0 0
          %2146 = vmatprep.subr.bf16.mxu0 0
          %2147 = vmatpush2.bf16.msra.mxu0 0
          %2148 = vmatprep.subr.bf16.mxu0 0
          %2149 = vmatpush2.bf16.msra.mxu0 0
          %2150 = vmatprep.subr.bf16.mxu0 0
          %2151 = vmatpush2.bf16.msra.mxu0 0
          %2152 = vmatprep.subr.bf16.mxu0 0
          %2153 = vmatpush2.bf16.msra.mxu0 0
          %2154 = vmatprep.mubr.bf16.mxu0 0
          %2155 = vmatmul.mubr.bf16.gmra.mxu0 %v2120
          %v2156 = vpop.f32.mrf.mxu0
          %v2157 = vadd.f32 %v2105, %v2156
          %v2158 = vpop.f32.mrf.mxu0
          %v2159 = vpop.f32.mrf.mxu0
          %v2160 = vadd.f32 %v2105, %v2159
          %v2161 = vpop.f32.mrf.mxu0
          %2162 = vdwg.mxu0
          %v2163 = vmax.f32 %v2157, 0.0
          %v2164 = vmax.f32 %v2160, 0.0
          %v2165 = vand.u32 2147483647, %v2157
          %v2166 = vand.u32 2147483647, %v2160
          %v2167 = vsub.f32 0.0, %v2165
          %v2168 = vsub.f32 0.0, %v2166
          %v2169 = vmul.f32 %v2167, 1.442695
          %v2170 = vpow.pop %v2169
          %v2171 = vmul.f32 %v2168, 1.442695
          %v2172 = vpow.pop %v2171
          %v2173 = vadd.f32 %v2170, 1.0
          %v2174 = vadd.f32 %v2172, 1.0
          %v2175 = vlog2.pop %v2173
          %v2176 = vmul.f32 %v2175, 0.6931472
          %v2177 = vlog2.pop %v2174
          %v2178 = vmul.f32 %v2177, 0.6931472
          %v2179 = vadd.f32 %v2163, %v2176
          %v2180 = vadd.f32 %v2164, %v2178
          %v2181 = vsub.f32 %v2179, 0.6931472
          %v2182 = vsub.f32 %v2180, 0.6931472
          %v2183 = vpack.c.bf16 %v2182, %v2181
          %v2184 = vld [vmem:[%s16] sm:$0xf]
          %v2185 = vld [vmem:[%s16 + $0x4] sm:$0xf]
          %v2186 = vld [vmem:[#allocation11] sm:$0x1]
          %v2188 = vlaneseq
          %v2189 = vshrl.u32 %v2188, 7
          %v2190 = vsub.s32 0, %v2189
          %v2191 = vrot.slane %v2186, %v2190
          %v2195 = vunpack.c.l.b16 %v2184
          %v2196 = vunpack.c.l.b16 %v2185
          %v2197 = vpack.c.b16 %v2196, %v2195
          %v2200 = vsel %vm1576, %v2183, 0
          %2202 = vmatprep.subr.bf16.mxu0 0
          %2203 = vmatpush1.bf16.msra.mxu0 0
          %2204 = vmatprep.subr.bf16.mxu0 0
          %2205 = vmatpush1.bf16.msra.mxu0 0
          %2206 = vmatprep.subr.bf16.mxu0 0
          %2207 = vmatpush1.bf16.msra.mxu0 0
          %2208 = vmatprep.subr.bf16.mxu0 0
          %2209 = vmatpush1.bf16.msra.mxu0 0
          %2210 = vmatprep.subr.bf16.mxu0 0
          %2211 = vmatpush1.bf16.msra.mxu0 0
          %2212 = vmatprep.subr.bf16.mxu0 0
          %2213 = vmatpush1.bf16.msra.mxu0 0
          %2214 = vmatprep.subr.bf16.mxu0 0
          %2215 = vmatpush1.bf16.msra.mxu0 0
          %2216 = vmatprep.subr.bf16.mxu0 0
          %2217 = vmatpush1.bf16.msra.mxu0 %v2197
          %2218 = vmatprep.subr.bf16.mxu0 0
          %2219 = vmatpush2.bf16.msra.mxu0 0
          %2220 = vmatprep.subr.bf16.mxu0 0
          %2221 = vmatpush2.bf16.msra.mxu0 0
          %2222 = vmatprep.subr.bf16.mxu0 0
          %2223 = vmatpush2.bf16.msra.mxu0 0
          %2224 = vmatprep.subr.bf16.mxu0 0
          %2225 = vmatpush2.bf16.msra.mxu0 0
          %2226 = vmatprep.subr.bf16.mxu0 0
          %2227 = vmatpush2.bf16.msra.mxu0 0
          %2228 = vmatprep.subr.bf16.mxu0 0
          %2229 = vmatpush2.bf16.msra.mxu0 0
          %2230 = vmatprep.subr.bf16.mxu0 0
          %2231 = vmatpush2.bf16.msra.mxu0 0
          %2232 = vmatprep.subr.bf16.mxu0 0
          %2233 = vmatpush2.bf16.msra.mxu0 0
          %2234 = vmatprep.mubr.bf16.mxu0 0
          %2235 = vmatmul.mubr.bf16.gmra.mxu0 %v2200
          %v2236 = vpop.f32.mrf.mxu0
          %v2237 = vadd.f32 %v2191, %v2236
          %v2238 = vpop.f32.mrf.mxu0
          %v2239 = vpop.f32.mrf.mxu0
          %v2240 = vadd.f32 %v2191, %v2239
          %v2241 = vpop.f32.mrf.mxu0
          %2242 = vdwg.mxu0
          %v2243 = vld [vmem:[%s18] sm:$0x3]
          %v2245 = vsel %vm1576, %v2243, 0
          %2247 = vmatprep.subr.mxu0 0.0
          %2248 = vmatpush1.msra.mxu0 0.0
          %2249 = vmatprep.subr.mxu0 0.0
          %2250 = vmatpush1.msra.mxu0 0.0
          %2251 = vmatprep.subr.mxu0 0.0
          %2252 = vmatpush1.msra.mxu0 0.0
          %2253 = vmatprep.subr.mxu0 0.0
          %2254 = vmatpush1.msra.mxu0 0.0
          %2255 = vmatprep.subr.mxu0 0.0
          %2256 = vmatpush1.msra.mxu0 0.0
          %2257 = vmatprep.subr.mxu0 0.0
          %2258 = vmatpush1.msra.mxu0 0.0
          %2259 = vmatprep.subr.mxu0 0.0
          %2260 = vmatpush1.msra.mxu0 0.0
          %2261 = vmatprep.subr.mxu0 0.0
          %2262 = vmatpush1.msra.mxu0 0.0
          %2263 = vmatprep.subr.mxu0 0.0
          %2264 = vmatpush1.msra.mxu0 0.0
          %2265 = vmatprep.subr.mxu0 0.0
          %2266 = vmatpush1.msra.mxu0 0.0
          %2267 = vmatprep.subr.mxu0 0.0
          %2268 = vmatpush1.msra.mxu0 0.0
          %2269 = vmatprep.subr.mxu0 0.0
          %2270 = vmatpush1.msra.mxu0 0.0
          %2271 = vmatprep.subr.mxu0 0.0
          %2272 = vmatpush1.msra.mxu0 0.0
          %2273 = vmatprep.subr.mxu0 0.0
          %2274 = vmatpush1.msra.mxu0 0.0
          %2275 = vmatprep.subr.mxu0 0.0
          %2276 = vmatpush1.msra.mxu0 %v2240
          %2277 = vmatprep.subr.mxu0 0.0
          %2278 = vmatpush1.msra.mxu0 %v2237
          %2279 = vmatprep.subr.mxu0 0.0
          %2280 = vmatpush2.msra.mxu0 0.0
          %2281 = vmatprep.subr.mxu0 0.0
          %2282 = vmatpush2.msra.mxu0 0.0
          %2283 = vmatprep.subr.mxu0 0.0
          %2284 = vmatpush2.msra.mxu0 0.0
          %2285 = vmatprep.subr.mxu0 0.0
          %2286 = vmatpush2.msra.mxu0 0.0
          %2287 = vmatprep.subr.mxu0 0.0
          %2288 = vmatpush2.msra.mxu0 0.0
          %2289 = vmatprep.subr.mxu0 0.0
          %2290 = vmatpush2.msra.mxu0 0.0
          %2291 = vmatprep.subr.mxu0 0.0
          %2292 = vmatpush2.msra.mxu0 0.0
          %2293 = vmatprep.subr.mxu0 0.0
          %2294 = vmatpush2.msra.mxu0 0.0
          %2295 = vmatprep.subr.mxu0 0.0
          %2296 = vmatpush2.msra.mxu0 0.0
          %2297 = vmatprep.subr.mxu0 0.0
          %2298 = vmatpush2.msra.mxu0 0.0
          %2299 = vmatprep.subr.mxu0 0.0
          %2300 = vmatpush2.msra.mxu0 0.0
          %2301 = vmatprep.subr.mxu0 0.0
          %2302 = vmatpush2.msra.mxu0 0.0
          %2303 = vmatprep.subr.mxu0 0.0
          %2304 = vmatpush2.msra.mxu0 0.0
          %2305 = vmatprep.subr.mxu0 0.0
          %2306 = vmatpush2.msra.mxu0 0.0
          %2307 = vmatprep.subr.mxu0 0.0
          %2308 = vmatpush2.msra.mxu0 0.0
          %2309 = vmatprep.subr.mxu0 0.0
          %2310 = vmatpush2.msra.mxu0 0.0
          %2311 = vmatprep.mubr.f32.mxu0 0.0
          %2312 = vmatmul.mubr.f32.gmra.mxu0 %v2245
          %v2313 = vpop.f32.mrf.mxu0
          %v2314 = vadd.f32 0.0, %v2313
          %v2315 = vpop.f32.mrf.mxu0
          %2316 = vdwg.mxu0
          %vm2317 = vcmask 1024
          %2318 = vst.msk [vmem:[%s19] sm:$0x3] %vm2317, %v2314
        $region131: #{tpu_custom_call.1} parent=87 // pred_fallthru
          _
        // Predicated region
        $region132: #{tpu_custom_call.1} parent=87 // pred_check
          %p2319 = pneg %p455
        $region133: #{tpu_custom_call.1} parent=87 // pred_check_branch
          %2321 = sbr.rel (%p2319) target = $region135
        $region134: #{tpu_custom_call.1} parent=87 // pred_region
          _
        $region135: #{tpu_custom_call.1} parent=87 // pred_fallthru
          _
        // Predicated region
        $region136: #{tpu_custom_call.1} parent=87 // pred_check
          %p2322 = pneg %p455
        $region137: #{tpu_custom_call.1} parent=87 // pred_check_branch
          %2324 = sbr.rel (%p2322) target = $region139
        $region138: #{tpu_custom_call.1} parent=87 // pred_region
          _
        $region139: #{tpu_custom_call.1} parent=87 // pred_fallthru
          _
      $region88: #{tpu_custom_call.1} parent=5 // pred_fallthru
        _
      %p2325 = scmp.le.s32.totalorder 2, %s35
      // Predicated region
      $region140: #{tpu_custom_call.1} parent=5 // pred_check
        %p2326 = pneg %p2325
      $region141: #{tpu_custom_call.1} parent=5 // pred_check_branch
        %2328 = sbr.rel (%p2326) target = $region143
      $region142: #{tpu_custom_call.1} parent=5 // pred_region
        %s2329 = ssub.s32 %s35, 2
      $region143: #{tpu_custom_call.1} parent=5 // pred_fallthru
        _
    $region6: #{tpu_custom_call.1} parent=1 // loop_footer
      %s39 = sadd.s32 1, %s35
    $region7: #{tpu_custom_call.1} parent=1 // loop_footer_branch
      %34 = sbr.rel target = $region3
    $region8: #{tpu_custom_call.1} parent=1 // loop_exit
      _
    %2330 = vsyncpa [#allocation13], 1
    %s2331 = scalar_lea.sflag [#allocation13], 1
    %2332 = vsyncpa %s2331, 1
    %2333 = vsyncpa [#allocation15], 1

</llo_original>
